<compile_context>
chip_gen: v7x
topology: tpu7x:2x2x1
jax: 0.10.0
libtpu: 0.0.40
codegen_flags: <defaults>
</compile_context>

<pallas_src>
import functools

import jax
import jax.numpy as jnp
from jax.experimental import pallas as pl
from jax.experimental.pallas import tpu as pltpu

NHEAD = 4
EPS = 1e-5

# Row indices in the packed (6, D) vector slab.
_BO, _G1, _BE1, _B2, _G2, _BE2 = range(6)


def _layernorm(y, gamma, beta):
    mu = jnp.mean(y, axis=-1, keepdims=True)
    var = jnp.mean((y - mu) ** 2, axis=-1, keepdims=True)
    return (y - mu) * jax.lax.rsqrt(var + EPS) * gamma + beta


def transformer_kernel(x_ref, wqkv_ref, bqkv_ref, wo_ref, w1_ref, b1_ref,
                       w2_ref, vec_ref, o_ref, *, batch, seq, nhead):
    x = x_ref[...].astype(jnp.float32)                    # (B*S, D)
    D = x.shape[-1]
    hd = D // nhead

    w_qkv = wqkv_ref[...]
    b_qkv = bqkv_ref[...]
    wo = wo_ref[...]
    w1 = w1_ref[...]
    b1 = b1_ref[...]
    w2 = w2_ref[...]
    vecs = vec_ref[...]

    # --- fused in-proj (q-scale pre-folded): one MXU push instead of three ---
    qkv = jnp.dot(x, w_qkv, preferred_element_type=jnp.float32) + b_qkv   # (B*S, 3D)

    # --- per-(batch, head) attention; static loops (B*H = 8 tiny 2-D matmuls).
    #     The output projection is accumulated per head -> no lane concatenate. ---
    attn_rows = []
    for b in range(batch):                                 # static, batch is small
        r0 = b * seq
        acc = None
        for h in range(nhead):                             # static, NHEAD = 4
            c0 = h * hd
            qh = qkv[r0:r0 + seq, c0:c0 + hd]                           # (S, hd)
            kh = qkv[r0:r0 + seq, D + c0:D + c0 + hd]                   # (S, hd)
            vh = qkv[r0:r0 + seq, 2 * D + c0:2 * D + c0 + hd]           # (S, hd)
            s = jnp.dot(qh, kh.T, preferred_element_type=jnp.float32)   # (S, S)
            s = s - jnp.max(s, axis=-1, keepdims=True)
            p = jnp.exp(s)
            inv = pl.reciprocal(jnp.sum(p, axis=-1, keepdims=True), approx=True)
            ctx = jnp.dot(p, vh, preferred_element_type=jnp.float32) * inv       # (S, hd)
            contrib = jnp.dot(ctx, wo[c0:c0 + hd, :],
                              preferred_element_type=jnp.float32)                # (S, D)
            acc = contrib if acc is None else acc + contrib
        attn_rows.append(acc)
    attn = jnp.concatenate(attn_rows, axis=0) + vecs[_BO:_BO + 1, :]     # (B*S, D)

    # --- residual + LayerNorm1 (dropout p=0 -> identity) ---
    y = _layernorm(x + attn, vecs[_G1:_G1 + 1, :], vecs[_BE1:_BE1 + 1, :])

    # --- Feed-forward: linear1 -> ReLU -> linear2 ---
    h1 = jnp.dot(y, w1, preferred_element_type=jnp.float32) + b1
    h1 = jnp.maximum(h1, 0.0)
    h2 = jnp.dot(h1, w2, preferred_element_type=jnp.float32) + vecs[_B2:_B2 + 1, :]

    # --- residual + LayerNorm2 ---
    z = _layernorm(y + h2, vecs[_G2:_G2 + 1, :], vecs[_BE2:_BE2 + 1, :])
    o_ref[...] = z.astype(o_ref.dtype)


def pack_params(params):
    """Fuse QKV (with 1/sqrt(hd) folded into q), pack small vectors into one slab."""
    D = params["wq"].shape[0]
    hd = D // NHEAD
    scale = 1.0 / jnp.sqrt(jnp.float32(hd))
    w_qkv = jnp.concatenate([params["wq"] * scale, params["wk"], params["wv"]], axis=1)
    b_qkv = jnp.concatenate([params["bq"] * scale, params["bk"], params["bv"]], axis=1)
    vecs = jnp.concatenate([params["bo"], params["g1"], params["be1"],
                            params["b2"], params["g2"], params["be2"]], axis=0)  # (6, D)
    return w_qkv, b_qkv, params["wo"], params["w1"], params["b1"], params["w2"], vecs


def single_transformer(x, params):
    """x: (B, S, D) float32.  params: dict of pre-transposed weights (x @ W layout)."""
    B, S, D = x.shape
    w_qkv, b_qkv, wo, w1, b1, w2, vecs = pack_params(params)
    xf = x.reshape(B * S, D)       # flatten batch*seq in the wrapper (free in XLA)

    kernel = functools.partial(transformer_kernel, batch=B, seq=S, nhead=NHEAD)
    operands = (xf, w_qkv, b_qkv, wo, w1, b1, w2, vecs)
    # No grid: the whole problem fits trivially in VMEM; every operand is mapped whole.
    # TODO(synk): for large B on v7x, add a "parallel" batch grid axis to use both TCs.
    in_specs = [pl.BlockSpec(memory_space=pltpu.MemorySpace.VMEM) for _ in operands]
    out_specs = pl.BlockSpec(memory_space=pltpu.MemorySpace.VMEM)

    out = pl.pallas_call(
        kernel,
        out_shape=jax.ShapeDtypeStruct((B * S, D), x.dtype),
        in_specs=in_specs,
        out_specs=out_specs,
    )(*operands)
    return out.reshape(B, S, D)


def reference_transformer(x, params):
    """Pure-JAX reference of the same post-norm TransformerEncoderLayer."""
    B, S, D = x.shape
    hd = D // NHEAD

    def one(xb):
        q = xb @ params["wq"] + params["bq"][0]
        k = xb @ params["wk"] + params["bk"][0]
        v = xb @ params["wv"] + params["bv"][0]
        outs = []
        for h in range(NHEAD):
            sl = slice(h * hd, (h + 1) * hd)
            s = (q[:, sl] @ k[:, sl].T) / jnp.sqrt(jnp.float32(hd))
            p = jax.nn.softmax(s, axis=-1)
            outs.append(p @ v[:, sl])
        attn = jnp.concatenate(outs, axis=-1) @ params["wo"] + params["bo"][0]
        y = _layernorm(xb + attn, params["g1"][0], params["be1"][0])
        h1 = jnp.maximum(y @ params["w1"] + params["b1"][0], 0.0)
        h2 = h1 @ params["w2"] + params["b2"][0]
        return _layernorm(y + h2, params["g2"][0], params["be2"][0])

    return jax.vmap(one)(x)


def init_params(key, D, F):
    ks = jax.random.split(key, 12)
    n = lambda k, shape: (jax.random.normal(k, shape, jnp.float32) * 0.05)
    # Weights stored pre-transposed for x @ W (PyTorch Linear stores (out, in), does x @ W.T).
    return {
        "wq": n(ks[0], (D, D)), "bq": n(ks[1], (1, D)),
        "wk": n(ks[2], (D, D)), "bk": n(ks[3], (1, D)),
        "wv": n(ks[4], (D, D)), "bv": n(ks[5], (1, D)),
        "wo": n(ks[6], (D, D)), "bo": n(ks[7], (1, D)),
        "g1": jnp.ones((1, D), jnp.float32), "be1": jnp.zeros((1, D), jnp.float32),
        "w1": n(ks[8], (D, F)), "b1": n(ks[9], (1, F)),
        "w2": n(ks[10], (F, D)), "b2": n(ks[11], (1, D)),
        "g2": jnp.ones((1, D), jnp.float32), "be2": jnp.zeros((1, D), jnp.float32),
    }


if __name__ == "__main__":
    B, S, D, F = 2, 8, 32, 256   # d_model=32 (divisible by nhead=4), dim_feedforward=256
    key = jax.random.PRNGKey(0)
    kx, kp = jax.random.split(key)
    x = jax.random.normal(kx, (B, S, D), jnp.float32)
    params = init_params(kp, D, F)

    out = single_transformer(x, params)
    out = jax.block_until_ready(out)

    ref = reference_transformer(x, params)
    assert out.shape == (B, S, D)
    # tolerance accounts for the EUP approximate reciprocal in the softmax denominator
    assert jnp.allclose(out, ref, rtol=1e-3, atol=1e-3), float(jnp.max(jnp.abs(out - ref)))

    print("KERNEL_OK")
</pallas_src>

<mosaic_0001>
module attributes {stable_mosaic.version = 11 : i64} {
  func.func @transformer_kernel(%arg0: memref<16x32xf32, #tpu.memory_space<vmem>>, %arg1: memref<32x96xf32, #tpu.memory_space<vmem>>, %arg2: memref<1x96xf32, #tpu.memory_space<vmem>>, %arg3: memref<32x32xf32, #tpu.memory_space<vmem>>, %arg4: memref<32x256xf32, #tpu.memory_space<vmem>>, %arg5: memref<1x256xf32, #tpu.memory_space<vmem>>, %arg6: memref<256x32xf32, #tpu.memory_space<vmem>>, %arg7: memref<6x32xf32, #tpu.memory_space<vmem>>, %arg8: memref<16x32xf32, #tpu.memory_space<vmem>>) attributes {dimension_semantics = [], scalar_prefetch = 0 : i64, scratch_operands = 0 : i64, tpu.core_type = #tpu.core_type<tc>} {
    %c0 = arith.constant 0 : index
    %c0_0 = arith.constant 0 : index
    %0 = vector.load %arg0[%c0, %c0_0] : memref<16x32xf32, #tpu.memory_space<vmem>>, vector<16x32xf32>
    %c0_1 = arith.constant 0 : index
    %c0_2 = arith.constant 0 : index
    %1 = vector.load %arg1[%c0_1, %c0_2] : memref<32x96xf32, #tpu.memory_space<vmem>>, vector<32x96xf32>
    %c0_3 = arith.constant 0 : index
    %c0_4 = arith.constant 0 : index
    %2 = vector.load %arg2[%c0_3, %c0_4] : memref<1x96xf32, #tpu.memory_space<vmem>>, vector<1x96xf32>
    %c0_5 = arith.constant 0 : index
    %c0_6 = arith.constant 0 : index
    %3 = vector.load %arg3[%c0_5, %c0_6] : memref<32x32xf32, #tpu.memory_space<vmem>>, vector<32x32xf32>
    %c0_7 = arith.constant 0 : index
    %c0_8 = arith.constant 0 : index
    %4 = vector.load %arg4[%c0_7, %c0_8] : memref<32x256xf32, #tpu.memory_space<vmem>>, vector<32x256xf32>
    %c0_9 = arith.constant 0 : index
    %c0_10 = arith.constant 0 : index
    %5 = vector.load %arg5[%c0_9, %c0_10] : memref<1x256xf32, #tpu.memory_space<vmem>>, vector<1x256xf32>
    %c0_11 = arith.constant 0 : index
    %c0_12 = arith.constant 0 : index
    %6 = vector.load %arg6[%c0_11, %c0_12] : memref<256x32xf32, #tpu.memory_space<vmem>>, vector<256x32xf32>
    %c0_13 = arith.constant 0 : index
    %c0_14 = arith.constant 0 : index
    %7 = vector.load %arg7[%c0_13, %c0_14] : memref<6x32xf32, #tpu.memory_space<vmem>>, vector<6x32xf32>
    %cst = arith.constant dense<0.000000e+00> : vector<16x96xf32>
    %8 = tpu.matmul %0, %1, %cst {dimension_numbers = #tpu.dot_dimension_numbers<[1], [0], [0], [1], [0, 0, 1, 1], [], []>} : vector<16x32xf32>, vector<32x96xf32>, vector<16x96xf32> -> vector<16x96xf32>
    %9 = vector.broadcast %2 : vector<1x96xf32> to vector<16x96xf32>
    %10 = arith.addf %8, %9 : vector<16x96xf32>
    %11 = vector.extract_strided_slice %10 {offsets = [0, 0], sizes = [8, 8], strides = [1, 1]} : vector<16x96xf32> to vector<8x8xf32>
    %12 = vector.extract_strided_slice %10 {offsets = [0, 32], sizes = [8, 8], strides = [1, 1]} : vector<16x96xf32> to vector<8x8xf32>
    %13 = vector.extract_strided_slice %10 {offsets = [0, 64], sizes = [8, 8], strides = [1, 1]} : vector<16x96xf32> to vector<8x8xf32>
    %14 = tpu.transpose %12, [1, 0] : vector<8x8xf32> -> vector<8x8xf32>
    %cst_15 = arith.constant dense<0.000000e+00> : vector<8x8xf32>
    %15 = tpu.matmul %11, %14, %cst_15 {dimension_numbers = #tpu.dot_dimension_numbers<[1], [0], [0], [1], [0, 0, 1, 1], [], []>} : vector<8x8xf32>, vector<8x8xf32>, vector<8x8xf32> -> vector<8x8xf32>
    %cst_16 = arith.constant dense<0xFF800000> : vector<8xf32>
    %16 = vector.multi_reduction <maximumf>, %15, %cst_16 [1] : vector<8x8xf32> to vector<8xf32>
    %17 = vector.shape_cast %16 : vector<8xf32> to vector<8x1xf32>
    %18 = vector.broadcast %17 : vector<8x1xf32> to vector<8x8xf32>
    %19 = arith.subf %15, %18 : vector<8x8xf32>
    %20 = math.exp %19 : vector<8x8xf32>
    %cst_17 = arith.constant dense<0.000000e+00> : vector<8xf32>
    %21 = vector.multi_reduction <add>, %20, %cst_17 [1] : vector<8x8xf32> to vector<8xf32>
    %22 = vector.shape_cast %21 : vector<8xf32> to vector<8x1xf32>
    %23 = tpu.reciprocal %22 {approx = true} : vector<8x1xf32> -> vector<8x1xf32>
    %cst_18 = arith.constant dense<0.000000e+00> : vector<8x8xf32>
    %24 = tpu.matmul %20, %13, %cst_18 {dimension_numbers = #tpu.dot_dimension_numbers<[1], [0], [0], [1], [0, 0, 1, 1], [], []>} : vector<8x8xf32>, vector<8x8xf32>, vector<8x8xf32> -> vector<8x8xf32>
    %25 = vector.broadcast %23 : vector<8x1xf32> to vector<8x8xf32>
    %26 = arith.mulf %24, %25 : vector<8x8xf32>
    %27 = vector.extract_strided_slice %3 {offsets = [0, 0], sizes = [8, 32], strides = [1, 1]} : vector<32x32xf32> to vector<8x32xf32>
    %cst_19 = arith.constant dense<0.000000e+00> : vector<8x32xf32>
    %28 = tpu.matmul %26, %27, %cst_19 {dimension_numbers = #tpu.dot_dimension_numbers<[1], [0], [0], [1], [0, 0, 1, 1], [], []>} : vector<8x8xf32>, vector<8x32xf32>, vector<8x32xf32> -> vector<8x32xf32>
    %29 = vector.extract_strided_slice %10 {offsets = [0, 8], sizes = [8, 8], strides = [1, 1]} : vector<16x96xf32> to vector<8x8xf32>
    %30 = vector.extract_strided_slice %10 {offsets = [0, 40], sizes = [8, 8], strides = [1, 1]} : vector<16x96xf32> to vector<8x8xf32>
    %31 = vector.extract_strided_slice %10 {offsets = [0, 72], sizes = [8, 8], strides = [1, 1]} : vector<16x96xf32> to vector<8x8xf32>
    %32 = tpu.transpose %30, [1, 0] : vector<8x8xf32> -> vector<8x8xf32>
    %cst_20 = arith.constant dense<0.000000e+00> : vector<8x8xf32>
    %33 = tpu.matmul %29, %32, %cst_20 {dimension_numbers = #tpu.dot_dimension_numbers<[1], [0], [0], [1], [0, 0, 1, 1], [], []>} : vector<8x8xf32>, vector<8x8xf32>, vector<8x8xf32> -> vector<8x8xf32>
    %cst_21 = arith.constant dense<0xFF800000> : vector<8xf32>
    %34 = vector.multi_reduction <maximumf>, %33, %cst_21 [1] : vector<8x8xf32> to vector<8xf32>
    %35 = vector.shape_cast %34 : vector<8xf32> to vector<8x1xf32>
    %36 = vector.broadcast %35 : vector<8x1xf32> to vector<8x8xf32>
    %37 = arith.subf %33, %36 : vector<8x8xf32>
    %38 = math.exp %37 : vector<8x8xf32>
    %cst_22 = arith.constant dense<0.000000e+00> : vector<8xf32>
    %39 = vector.multi_reduction <add>, %38, %cst_22 [1] : vector<8x8xf32> to vector<8xf32>
    %40 = vector.shape_cast %39 : vector<8xf32> to vector<8x1xf32>
    %41 = tpu.reciprocal %40 {approx = true} : vector<8x1xf32> -> vector<8x1xf32>
    %cst_23 = arith.constant dense<0.000000e+00> : vector<8x8xf32>
    %42 = tpu.matmul %38, %31, %cst_23 {dimension_numbers = #tpu.dot_dimension_numbers<[1], [0], [0], [1], [0, 0, 1, 1], [], []>} : vector<8x8xf32>, vector<8x8xf32>, vector<8x8xf32> -> vector<8x8xf32>
    %43 = vector.broadcast %41 : vector<8x1xf32> to vector<8x8xf32>
    %44 = arith.mulf %42, %43 : vector<8x8xf32>
    %45 = vector.extract_strided_slice %3 {offsets = [8, 0], sizes = [8, 32], strides = [1, 1]} : vector<32x32xf32> to vector<8x32xf32>
    %cst_24 = arith.constant dense<0.000000e+00> : vector<8x32xf32>
    %46 = tpu.matmul %44, %45, %cst_24 {dimension_numbers = #tpu.dot_dimension_numbers<[1], [0], [0], [1], [0, 0, 1, 1], [], []>} : vector<8x8xf32>, vector<8x32xf32>, vector<8x32xf32> -> vector<8x32xf32>
    %47 = arith.addf %28, %46 : vector<8x32xf32>
    %48 = vector.extract_strided_slice %10 {offsets = [0, 16], sizes = [8, 8], strides = [1, 1]} : vector<16x96xf32> to vector<8x8xf32>
    %49 = vector.extract_strided_slice %10 {offsets = [0, 48], sizes = [8, 8], strides = [1, 1]} : vector<16x96xf32> to vector<8x8xf32>
    %50 = vector.extract_strided_slice %10 {offsets = [0, 80], sizes = [8, 8], strides = [1, 1]} : vector<16x96xf32> to vector<8x8xf32>
    %51 = tpu.transpose %49, [1, 0] : vector<8x8xf32> -> vector<8x8xf32>
    %cst_25 = arith.constant dense<0.000000e+00> : vector<8x8xf32>
    %52 = tpu.matmul %48, %51, %cst_25 {dimension_numbers = #tpu.dot_dimension_numbers<[1], [0], [0], [1], [0, 0, 1, 1], [], []>} : vector<8x8xf32>, vector<8x8xf32>, vector<8x8xf32> -> vector<8x8xf32>
    %cst_26 = arith.constant dense<0xFF800000> : vector<8xf32>
    %53 = vector.multi_reduction <maximumf>, %52, %cst_26 [1] : vector<8x8xf32> to vector<8xf32>
    %54 = vector.shape_cast %53 : vector<8xf32> to vector<8x1xf32>
    %55 = vector.broadcast %54 : vector<8x1xf32> to vector<8x8xf32>
    %56 = arith.subf %52, %55 : vector<8x8xf32>
    %57 = math.exp %56 : vector<8x8xf32>
    %cst_27 = arith.constant dense<0.000000e+00> : vector<8xf32>
    %58 = vector.multi_reduction <add>, %57, %cst_27 [1] : vector<8x8xf32> to vector<8xf32>
    %59 = vector.shape_cast %58 : vector<8xf32> to vector<8x1xf32>
    %60 = tpu.reciprocal %59 {approx = true} : vector<8x1xf32> -> vector<8x1xf32>
    %cst_28 = arith.constant dense<0.000000e+00> : vector<8x8xf32>
    %61 = tpu.matmul %57, %50, %cst_28 {dimension_numbers = #tpu.dot_dimension_numbers<[1], [0], [0], [1], [0, 0, 1, 1], [], []>} : vector<8x8xf32>, vector<8x8xf32>, vector<8x8xf32> -> vector<8x8xf32>
    %62 = vector.broadcast %60 : vector<8x1xf32> to vector<8x8xf32>
    %63 = arith.mulf %61, %62 : vector<8x8xf32>
    %64 = vector.extract_strided_slice %3 {offsets = [16, 0], sizes = [8, 32], strides = [1, 1]} : vector<32x32xf32> to vector<8x32xf32>
    %cst_29 = arith.constant dense<0.000000e+00> : vector<8x32xf32>
    %65 = tpu.matmul %63, %64, %cst_29 {dimension_numbers = #tpu.dot_dimension_numbers<[1], [0], [0], [1], [0, 0, 1, 1], [], []>} : vector<8x8xf32>, vector<8x32xf32>, vector<8x32xf32> -> vector<8x32xf32>
    %66 = arith.addf %47, %65 : vector<8x32xf32>
    %67 = vector.extract_strided_slice %10 {offsets = [0, 24], sizes = [8, 8], strides = [1, 1]} : vector<16x96xf32> to vector<8x8xf32>
    %68 = vector.extract_strided_slice %10 {offsets = [0, 56], sizes = [8, 8], strides = [1, 1]} : vector<16x96xf32> to vector<8x8xf32>
    %69 = vector.extract_strided_slice %10 {offsets = [0, 88], sizes = [8, 8], strides = [1, 1]} : vector<16x96xf32> to vector<8x8xf32>
    %70 = tpu.transpose %68, [1, 0] : vector<8x8xf32> -> vector<8x8xf32>
    %cst_30 = arith.constant dense<0.000000e+00> : vector<8x8xf32>
    %71 = tpu.matmul %67, %70, %cst_30 {dimension_numbers = #tpu.dot_dimension_numbers<[1], [0], [0], [1], [0, 0, 1, 1], [], []>} : vector<8x8xf32>, vector<8x8xf32>, vector<8x8xf32> -> vector<8x8xf32>
    %cst_31 = arith.constant dense<0xFF800000> : vector<8xf32>
    %72 = vector.multi_reduction <maximumf>, %71, %cst_31 [1] : vector<8x8xf32> to vector<8xf32>
    %73 = vector.shape_cast %72 : vector<8xf32> to vector<8x1xf32>
    %74 = vector.broadcast %73 : vector<8x1xf32> to vector<8x8xf32>
    %75 = arith.subf %71, %74 : vector<8x8xf32>
    %76 = math.exp %75 : vector<8x8xf32>
    %cst_32 = arith.constant dense<0.000000e+00> : vector<8xf32>
    %77 = vector.multi_reduction <add>, %76, %cst_32 [1] : vector<8x8xf32> to vector<8xf32>
    %78 = vector.shape_cast %77 : vector<8xf32> to vector<8x1xf32>
    %79 = tpu.reciprocal %78 {approx = true} : vector<8x1xf32> -> vector<8x1xf32>
    %cst_33 = arith.constant dense<0.000000e+00> : vector<8x8xf32>
    %80 = tpu.matmul %76, %69, %cst_33 {dimension_numbers = #tpu.dot_dimension_numbers<[1], [0], [0], [1], [0, 0, 1, 1], [], []>} : vector<8x8xf32>, vector<8x8xf32>, vector<8x8xf32> -> vector<8x8xf32>
    %81 = vector.broadcast %79 : vector<8x1xf32> to vector<8x8xf32>
    %82 = arith.mulf %80, %81 : vector<8x8xf32>
    %83 = vector.extract_strided_slice %3 {offsets = [24, 0], sizes = [8, 32], strides = [1, 1]} : vector<32x32xf32> to vector<8x32xf32>
    %cst_34 = arith.constant dense<0.000000e+00> : vector<8x32xf32>
    %84 = tpu.matmul %82, %83, %cst_34 {dimension_numbers = #tpu.dot_dimension_numbers<[1], [0], [0], [1], [0, 0, 1, 1], [], []>} : vector<8x8xf32>, vector<8x32xf32>, vector<8x32xf32> -> vector<8x32xf32>
    %85 = arith.addf %66, %84 : vector<8x32xf32>
    %86 = vector.extract_strided_slice %10 {offsets = [8, 0], sizes = [8, 8], strides = [1, 1]} : vector<16x96xf32> to vector<8x8xf32>
    %87 = vector.extract_strided_slice %10 {offsets = [8, 32], sizes = [8, 8], strides = [1, 1]} : vector<16x96xf32> to vector<8x8xf32>
    %88 = vector.extract_strided_slice %10 {offsets = [8, 64], sizes = [8, 8], strides = [1, 1]} : vector<16x96xf32> to vector<8x8xf32>
    %89 = tpu.transpose %87, [1, 0] : vector<8x8xf32> -> vector<8x8xf32>
    %cst_35 = arith.constant dense<0.000000e+00> : vector<8x8xf32>
    %90 = tpu.matmul %86, %89, %cst_35 {dimension_numbers = #tpu.dot_dimension_numbers<[1], [0], [0], [1], [0, 0, 1, 1], [], []>} : vector<8x8xf32>, vector<8x8xf32>, vector<8x8xf32> -> vector<8x8xf32>
    %cst_36 = arith.constant dense<0xFF800000> : vector<8xf32>
    %91 = vector.multi_reduction <maximumf>, %90, %cst_36 [1] : vector<8x8xf32> to vector<8xf32>
    %92 = vector.shape_cast %91 : vector<8xf32> to vector<8x1xf32>
    %93 = vector.broadcast %92 : vector<8x1xf32> to vector<8x8xf32>
    %94 = arith.subf %90, %93 : vector<8x8xf32>
    %95 = math.exp %94 : vector<8x8xf32>
    %cst_37 = arith.constant dense<0.000000e+00> : vector<8xf32>
    %96 = vector.multi_reduction <add>, %95, %cst_37 [1] : vector<8x8xf32> to vector<8xf32>
    %97 = vector.shape_cast %96 : vector<8xf32> to vector<8x1xf32>
    %98 = tpu.reciprocal %97 {approx = true} : vector<8x1xf32> -> vector<8x1xf32>
    %cst_38 = arith.constant dense<0.000000e+00> : vector<8x8xf32>
    %99 = tpu.matmul %95, %88, %cst_38 {dimension_numbers = #tpu.dot_dimension_numbers<[1], [0], [0], [1], [0, 0, 1, 1], [], []>} : vector<8x8xf32>, vector<8x8xf32>, vector<8x8xf32> -> vector<8x8xf32>
    %100 = vector.broadcast %98 : vector<8x1xf32> to vector<8x8xf32>
    %101 = arith.mulf %99, %100 : vector<8x8xf32>
    %102 = vector.extract_strided_slice %3 {offsets = [0, 0], sizes = [8, 32], strides = [1, 1]} : vector<32x32xf32> to vector<8x32xf32>
    %cst_39 = arith.constant dense<0.000000e+00> : vector<8x32xf32>
    %103 = tpu.matmul %101, %102, %cst_39 {dimension_numbers = #tpu.dot_dimension_numbers<[1], [0], [0], [1], [0, 0, 1, 1], [], []>} : vector<8x8xf32>, vector<8x32xf32>, vector<8x32xf32> -> vector<8x32xf32>
    %104 = vector.extract_strided_slice %10 {offsets = [8, 8], sizes = [8, 8], strides = [1, 1]} : vector<16x96xf32> to vector<8x8xf32>
    %105 = vector.extract_strided_slice %10 {offsets = [8, 40], sizes = [8, 8], strides = [1, 1]} : vector<16x96xf32> to vector<8x8xf32>
    %106 = vector.extract_strided_slice %10 {offsets = [8, 72], sizes = [8, 8], strides = [1, 1]} : vector<16x96xf32> to vector<8x8xf32>
    %107 = tpu.transpose %105, [1, 0] : vector<8x8xf32> -> vector<8x8xf32>
    %cst_40 = arith.constant dense<0.000000e+00> : vector<8x8xf32>
    %108 = tpu.matmul %104, %107, %cst_40 {dimension_numbers = #tpu.dot_dimension_numbers<[1], [0], [0], [1], [0, 0, 1, 1], [], []>} : vector<8x8xf32>, vector<8x8xf32>, vector<8x8xf32> -> vector<8x8xf32>
    %cst_41 = arith.constant dense<0xFF800000> : vector<8xf32>
    %109 = vector.multi_reduction <maximumf>, %108, %cst_41 [1] : vector<8x8xf32> to vector<8xf32>
    %110 = vector.shape_cast %109 : vector<8xf32> to vector<8x1xf32>
    %111 = vector.broadcast %110 : vector<8x1xf32> to vector<8x8xf32>
    %112 = arith.subf %108, %111 : vector<8x8xf32>
    %113 = math.exp %112 : vector<8x8xf32>
    %cst_42 = arith.constant dense<0.000000e+00> : vector<8xf32>
    %114 = vector.multi_reduction <add>, %113, %cst_42 [1] : vector<8x8xf32> to vector<8xf32>
    %115 = vector.shape_cast %114 : vector<8xf32> to vector<8x1xf32>
    %116 = tpu.reciprocal %115 {approx = true} : vector<8x1xf32> -> vector<8x1xf32>
    %cst_43 = arith.constant dense<0.000000e+00> : vector<8x8xf32>
    %117 = tpu.matmul %113, %106, %cst_43 {dimension_numbers = #tpu.dot_dimension_numbers<[1], [0], [0], [1], [0, 0, 1, 1], [], []>} : vector<8x8xf32>, vector<8x8xf32>, vector<8x8xf32> -> vector<8x8xf32>
    %118 = vector.broadcast %116 : vector<8x1xf32> to vector<8x8xf32>
    %119 = arith.mulf %117, %118 : vector<8x8xf32>
    %120 = vector.extract_strided_slice %3 {offsets = [8, 0], sizes = [8, 32], strides = [1, 1]} : vector<32x32xf32> to vector<8x32xf32>
    %cst_44 = arith.constant dense<0.000000e+00> : vector<8x32xf32>
    %121 = tpu.matmul %119, %120, %cst_44 {dimension_numbers = #tpu.dot_dimension_numbers<[1], [0], [0], [1], [0, 0, 1, 1], [], []>} : vector<8x8xf32>, vector<8x32xf32>, vector<8x32xf32> -> vector<8x32xf32>
    %122 = arith.addf %103, %121 : vector<8x32xf32>
    %123 = vector.extract_strided_slice %10 {offsets = [8, 16], sizes = [8, 8], strides = [1, 1]} : vector<16x96xf32> to vector<8x8xf32>
    %124 = vector.extract_strided_slice %10 {offsets = [8, 48], sizes = [8, 8], strides = [1, 1]} : vector<16x96xf32> to vector<8x8xf32>
    %125 = vector.extract_strided_slice %10 {offsets = [8, 80], sizes = [8, 8], strides = [1, 1]} : vector<16x96xf32> to vector<8x8xf32>
    %126 = tpu.transpose %124, [1, 0] : vector<8x8xf32> -> vector<8x8xf32>
    %cst_45 = arith.constant dense<0.000000e+00> : vector<8x8xf32>
    %127 = tpu.matmul %123, %126, %cst_45 {dimension_numbers = #tpu.dot_dimension_numbers<[1], [0], [0], [1], [0, 0, 1, 1], [], []>} : vector<8x8xf32>, vector<8x8xf32>, vector<8x8xf32> -> vector<8x8xf32>
    %cst_46 = arith.constant dense<0xFF800000> : vector<8xf32>
    %128 = vector.multi_reduction <maximumf>, %127, %cst_46 [1] : vector<8x8xf32> to vector<8xf32>
    %129 = vector.shape_cast %128 : vector<8xf32> to vector<8x1xf32>
    %130 = vector.broadcast %129 : vector<8x1xf32> to vector<8x8xf32>
    %131 = arith.subf %127, %130 : vector<8x8xf32>
    %132 = math.exp %131 : vector<8x8xf32>
    %cst_47 = arith.constant dense<0.000000e+00> : vector<8xf32>
    %133 = vector.multi_reduction <add>, %132, %cst_47 [1] : vector<8x8xf32> to vector<8xf32>
    %134 = vector.shape_cast %133 : vector<8xf32> to vector<8x1xf32>
    %135 = tpu.reciprocal %134 {approx = true} : vector<8x1xf32> -> vector<8x1xf32>
    %cst_48 = arith.constant dense<0.000000e+00> : vector<8x8xf32>
    %136 = tpu.matmul %132, %125, %cst_48 {dimension_numbers = #tpu.dot_dimension_numbers<[1], [0], [0], [1], [0, 0, 1, 1], [], []>} : vector<8x8xf32>, vector<8x8xf32>, vector<8x8xf32> -> vector<8x8xf32>
    %137 = vector.broadcast %135 : vector<8x1xf32> to vector<8x8xf32>
    %138 = arith.mulf %136, %137 : vector<8x8xf32>
    %139 = vector.extract_strided_slice %3 {offsets = [16, 0], sizes = [8, 32], strides = [1, 1]} : vector<32x32xf32> to vector<8x32xf32>
    %cst_49 = arith.constant dense<0.000000e+00> : vector<8x32xf32>
    %140 = tpu.matmul %138, %139, %cst_49 {dimension_numbers = #tpu.dot_dimension_numbers<[1], [0], [0], [1], [0, 0, 1, 1], [], []>} : vector<8x8xf32>, vector<8x32xf32>, vector<8x32xf32> -> vector<8x32xf32>
    %141 = arith.addf %122, %140 : vector<8x32xf32>
    %142 = vector.extract_strided_slice %10 {offsets = [8, 24], sizes = [8, 8], strides = [1, 1]} : vector<16x96xf32> to vector<8x8xf32>
    %143 = vector.extract_strided_slice %10 {offsets = [8, 56], sizes = [8, 8], strides = [1, 1]} : vector<16x96xf32> to vector<8x8xf32>
    %144 = vector.extract_strided_slice %10 {offsets = [8, 88], sizes = [8, 8], strides = [1, 1]} : vector<16x96xf32> to vector<8x8xf32>
    %145 = tpu.transpose %143, [1, 0] : vector<8x8xf32> -> vector<8x8xf32>
    %cst_50 = arith.constant dense<0.000000e+00> : vector<8x8xf32>
    %146 = tpu.matmul %142, %145, %cst_50 {dimension_numbers = #tpu.dot_dimension_numbers<[1], [0], [0], [1], [0, 0, 1, 1], [], []>} : vector<8x8xf32>, vector<8x8xf32>, vector<8x8xf32> -> vector<8x8xf32>
    %cst_51 = arith.constant dense<0xFF800000> : vector<8xf32>
    %147 = vector.multi_reduction <maximumf>, %146, %cst_51 [1] : vector<8x8xf32> to vector<8xf32>
    %148 = vector.shape_cast %147 : vector<8xf32> to vector<8x1xf32>
    %149 = vector.broadcast %148 : vector<8x1xf32> to vector<8x8xf32>
    %150 = arith.subf %146, %149 : vector<8x8xf32>
    %151 = math.exp %150 : vector<8x8xf32>
    %cst_52 = arith.constant dense<0.000000e+00> : vector<8xf32>
    %152 = vector.multi_reduction <add>, %151, %cst_52 [1] : vector<8x8xf32> to vector<8xf32>
    %153 = vector.shape_cast %152 : vector<8xf32> to vector<8x1xf32>
    %154 = tpu.reciprocal %153 {approx = true} : vector<8x1xf32> -> vector<8x1xf32>
    %cst_53 = arith.constant dense<0.000000e+00> : vector<8x8xf32>
    %155 = tpu.matmul %151, %144, %cst_53 {dimension_numbers = #tpu.dot_dimension_numbers<[1], [0], [0], [1], [0, 0, 1, 1], [], []>} : vector<8x8xf32>, vector<8x8xf32>, vector<8x8xf32> -> vector<8x8xf32>
    %156 = vector.broadcast %154 : vector<8x1xf32> to vector<8x8xf32>
    %157 = arith.mulf %155, %156 : vector<8x8xf32>
    %158 = vector.extract_strided_slice %3 {offsets = [24, 0], sizes = [8, 32], strides = [1, 1]} : vector<32x32xf32> to vector<8x32xf32>
    %cst_54 = arith.constant dense<0.000000e+00> : vector<8x32xf32>
    %159 = tpu.matmul %157, %158, %cst_54 {dimension_numbers = #tpu.dot_dimension_numbers<[1], [0], [0], [1], [0, 0, 1, 1], [], []>} : vector<8x8xf32>, vector<8x32xf32>, vector<8x32xf32> -> vector<8x32xf32>
    %160 = arith.addf %141, %159 : vector<8x32xf32>
    %161 = tpu.concatenate %85, %160 in 0 : vector<8x32xf32>, vector<8x32xf32> -> vector<16x32xf32>
    %162 = vector.extract_strided_slice %7 {offsets = [0, 0], sizes = [1, 32], strides = [1, 1]} : vector<6x32xf32> to vector<1x32xf32>
    %163 = vector.broadcast %162 : vector<1x32xf32> to vector<16x32xf32>
    %164 = arith.addf %161, %163 : vector<16x32xf32>
    %165 = arith.addf %0, %164 : vector<16x32xf32>
    %166 = vector.extract_strided_slice %7 {offsets = [1, 0], sizes = [1, 32], strides = [1, 1]} : vector<6x32xf32> to vector<1x32xf32>
    %167 = vector.extract_strided_slice %7 {offsets = [2, 0], sizes = [1, 32], strides = [1, 1]} : vector<6x32xf32> to vector<1x32xf32>
    %cst_55 = arith.constant dense<0.000000e+00> : vector<16xf32>
    %168 = vector.multi_reduction <add>, %165, %cst_55 [1] : vector<16x32xf32> to vector<16xf32>
    %169 = vector.shape_cast %168 : vector<16xf32> to vector<16x1xf32>
    %cst_56 = arith.constant 3.200000e+01 : f32
    %170 = vector.broadcast %cst_56 : f32 to vector<16x1xf32>
    %171 = arith.divf %169, %170 : vector<16x1xf32>
    %172 = vector.broadcast %171 : vector<16x1xf32> to vector<16x32xf32>
    %173 = arith.subf %165, %172 : vector<16x32xf32>
    %174 = arith.mulf %173, %173 : vector<16x32xf32>
    %cst_57 = arith.constant dense<0.000000e+00> : vector<16xf32>
    %175 = vector.multi_reduction <add>, %174, %cst_57 [1] : vector<16x32xf32> to vector<16xf32>
    %176 = vector.shape_cast %175 : vector<16xf32> to vector<16x1xf32>
    %cst_58 = arith.constant 3.200000e+01 : f32
    %177 = vector.broadcast %cst_58 : f32 to vector<16x1xf32>
    %178 = arith.divf %176, %177 : vector<16x1xf32>
    %179 = vector.broadcast %171 : vector<16x1xf32> to vector<16x32xf32>
    %180 = arith.subf %165, %179 : vector<16x32xf32>
    %cst_59 = arith.constant 9.99999974E-6 : f32
    %181 = vector.broadcast %cst_59 : f32 to vector<16x1xf32>
    %182 = arith.addf %178, %181 : vector<16x1xf32>
    %183 = math.rsqrt %182 : vector<16x1xf32>
    %184 = vector.broadcast %183 : vector<16x1xf32> to vector<16x32xf32>
    %185 = arith.mulf %180, %184 : vector<16x32xf32>
    %186 = vector.broadcast %166 : vector<1x32xf32> to vector<16x32xf32>
    %187 = arith.mulf %185, %186 : vector<16x32xf32>
    %188 = vector.broadcast %167 : vector<1x32xf32> to vector<16x32xf32>
    %189 = arith.addf %187, %188 : vector<16x32xf32>
    %cst_60 = arith.constant dense<0.000000e+00> : vector<16x256xf32>
    %190 = tpu.matmul %189, %4, %cst_60 {dimension_numbers = #tpu.dot_dimension_numbers<[1], [0], [0], [1], [0, 0, 1, 1], [], []>} : vector<16x32xf32>, vector<32x256xf32>, vector<16x256xf32> -> vector<16x256xf32>
    %191 = vector.broadcast %5 : vector<1x256xf32> to vector<16x256xf32>
    %192 = arith.addf %190, %191 : vector<16x256xf32>
    %cst_61 = arith.constant 0.000000e+00 : f32
    %193 = vector.broadcast %cst_61 : f32 to vector<16x256xf32>
    %194 = arith.maximumf %192, %193 : vector<16x256xf32>
    %cst_62 = arith.constant dense<0.000000e+00> : vector<16x32xf32>
    %195 = tpu.matmul %194, %6, %cst_62 {dimension_numbers = #tpu.dot_dimension_numbers<[1], [0], [0], [1], [0, 0, 1, 1], [], []>} : vector<16x256xf32>, vector<256x32xf32>, vector<16x32xf32> -> vector<16x32xf32>
    %196 = vector.extract_strided_slice %7 {offsets = [3, 0], sizes = [1, 32], strides = [1, 1]} : vector<6x32xf32> to vector<1x32xf32>
    %197 = vector.broadcast %196 : vector<1x32xf32> to vector<16x32xf32>
    %198 = arith.addf %195, %197 : vector<16x32xf32>
    %199 = arith.addf %189, %198 : vector<16x32xf32>
    %200 = vector.extract_strided_slice %7 {offsets = [4, 0], sizes = [1, 32], strides = [1, 1]} : vector<6x32xf32> to vector<1x32xf32>
    %201 = vector.extract_strided_slice %7 {offsets = [5, 0], sizes = [1, 32], strides = [1, 1]} : vector<6x32xf32> to vector<1x32xf32>
    %cst_63 = arith.constant dense<0.000000e+00> : vector<16xf32>
    %202 = vector.multi_reduction <add>, %199, %cst_63 [1] : vector<16x32xf32> to vector<16xf32>
    %203 = vector.shape_cast %202 : vector<16xf32> to vector<16x1xf32>
    %cst_64 = arith.constant 3.200000e+01 : f32
    %204 = vector.broadcast %cst_64 : f32 to vector<16x1xf32>
    %205 = arith.divf %203, %204 : vector<16x1xf32>
    %206 = vector.broadcast %205 : vector<16x1xf32> to vector<16x32xf32>
    %207 = arith.subf %199, %206 : vector<16x32xf32>
    %208 = arith.mulf %207, %207 : vector<16x32xf32>
    %cst_65 = arith.constant dense<0.000000e+00> : vector<16xf32>
    %209 = vector.multi_reduction <add>, %208, %cst_65 [1] : vector<16x32xf32> to vector<16xf32>
    %210 = vector.shape_cast %209 : vector<16xf32> to vector<16x1xf32>
    %cst_66 = arith.constant 3.200000e+01 : f32
    %211 = vector.broadcast %cst_66 : f32 to vector<16x1xf32>
    %212 = arith.divf %210, %211 : vector<16x1xf32>
    %213 = vector.broadcast %205 : vector<16x1xf32> to vector<16x32xf32>
    %214 = arith.subf %199, %213 : vector<16x32xf32>
    %cst_67 = arith.constant 9.99999974E-6 : f32
    %215 = vector.broadcast %cst_67 : f32 to vector<16x1xf32>
    %216 = arith.addf %212, %215 : vector<16x1xf32>
    %217 = math.rsqrt %216 : vector<16x1xf32>
    %218 = vector.broadcast %217 : vector<16x1xf32> to vector<16x32xf32>
    %219 = arith.mulf %214, %218 : vector<16x32xf32>
    %220 = vector.broadcast %200 : vector<1x32xf32> to vector<16x32xf32>
    %221 = arith.mulf %219, %220 : vector<16x32xf32>
    %222 = vector.broadcast %201 : vector<1x32xf32> to vector<16x32xf32>
    %223 = arith.addf %221, %222 : vector<16x32xf32>
    %c0_68 = arith.constant 0 : index
    %c0_69 = arith.constant 0 : index
    %224 = vector.load %arg8[%c0_68, %c0_69] : memref<16x32xf32, #tpu.memory_space<vmem>>, vector<16x32xf32>
    tpu.vector_store %arg8[%c0_68, %c0_69], %223 {strides = array<i32>} : memref<16x32xf32, #tpu.memory_space<vmem>>, vector<16x32xf32>,
    return
  }
}

</mosaic_0001>

<llo_original>
// kernel: tpu_custom_call.1
$region0: #{tpu_custom_call.1}
  #allocation0 [shape = 'u32[]', space=smem, size = 0x4, offset = 0x4, fixed_abs, tag = 'smem constant byte address 0x4 - core index']
  #allocation1 [shape = 'u32[144,128]{1,0:T(1,128)}', space=vmem, size = 0x12000, scoped, tag = 'internal scratch']
  %s0 = inlined_call_operand.vmem [shape: f32[16,32], index: 0, kind: input, shape index: {}]
  %s1 = inlined_call_operand.vmem [shape: f32[32,96], index: 1, kind: input, shape index: {}]
  %s2 = inlined_call_operand.vmem [shape: f32[1,96], index: 2, kind: input, shape index: {}]
  %s3 = inlined_call_operand.vmem [shape: f32[32,32], index: 3, kind: input, shape index: {}]
  %s4 = inlined_call_operand.vmem [shape: f32[32,256], index: 4, kind: input, shape index: {}]
  %s5 = inlined_call_operand.vmem [shape: f32[1,256], index: 5, kind: input, shape index: {}]
  %s6 = inlined_call_operand.vmem [shape: f32[256,32], index: 6, kind: input, shape index: {}]
  %s7 = inlined_call_operand.vmem [shape: f32[6,32], index: 7, kind: input, shape index: {}]
  %s8 = inlined_call_operand.hbm [shape: f32[16,32], index: 8, kind: output, shape index: {}]
  %s9 = sld [smem:[#allocation0]]
  $region42: #{tpu_custom_call.1} parent=0
    _
  %s11 = ssub.s32 1, %s9
  %s12 = scalar_select 0, %s11, %s9
  $region1: #{tpu_custom_call.1} parent=0
    #allocation2 [shape = 'u8[8192]{0}', space=vmem, size = 0x2000, scoped, tag = 'output window, operand 0, single buffered']
    #allocation3 [shape = 's32[1]{0}', space=sflag, size = 0x4, scoped, tag = 'scoped memory for tpu_custom_call.1']
    %13 = vsyncpa [#allocation3], 0
    // Predicated region
    $region2: #{tpu_custom_call.1} parent=1 // pred_check
      _
    $region3: #{tpu_custom_call.1} parent=1 // pred_check_branch
      %15 = sbr.rel (0) target = $region5
    $region4: #{tpu_custom_call.1} parent=1 // pred_region
      _
    $region5: #{tpu_custom_call.1} parent=1 // pred_fallthru
      _
    // Predicated region
    $region6: #{tpu_custom_call.1} parent=1 // pred_check
      _
    $region7: #{tpu_custom_call.1} parent=1 // pred_check_branch
      %17 = sbr.rel (0) target = $region9
    $region8: #{tpu_custom_call.1} parent=1 // pred_region
      _
    $region9: #{tpu_custom_call.1} parent=1 // pred_fallthru
      _
    // Predicated region
    $region10: #{tpu_custom_call.1} parent=1 // pred_check
      _
    $region11: #{tpu_custom_call.1} parent=1 // pred_check_branch
      %19 = sbr.rel (0) target = $region13
    $region12: #{tpu_custom_call.1} parent=1 // pred_region
      _
    $region13: #{tpu_custom_call.1} parent=1 // pred_fallthru
      _
    // Predicated region
    $region14: #{tpu_custom_call.1} parent=1 // pred_check
      _
    $region15: #{tpu_custom_call.1} parent=1 // pred_check_branch
      %21 = sbr.rel (0) target = $region17
    $region16: #{tpu_custom_call.1} parent=1 // pred_region
      _
    $region17: #{tpu_custom_call.1} parent=1 // pred_fallthru
      _
    // Predicated region
    $region18: #{tpu_custom_call.1} parent=1 // pred_check
      _
    $region19: #{tpu_custom_call.1} parent=1 // pred_check_branch
      %23 = sbr.rel (0) target = $region21
    $region20: #{tpu_custom_call.1} parent=1 // pred_region
      _
    $region21: #{tpu_custom_call.1} parent=1 // pred_fallthru
      _
    // Predicated region
    $region22: #{tpu_custom_call.1} parent=1 // pred_check
      _
    $region23: #{tpu_custom_call.1} parent=1 // pred_check_branch
      %25 = sbr.rel (0) target = $region25
    $region24: #{tpu_custom_call.1} parent=1 // pred_region
      _
    $region25: #{tpu_custom_call.1} parent=1 // pred_fallthru
      _
    // Predicated region
    $region26: #{tpu_custom_call.1} parent=1 // pred_check
      _
    $region27: #{tpu_custom_call.1} parent=1 // pred_check_branch
      %27 = sbr.rel (0) target = $region29
    $region28: #{tpu_custom_call.1} parent=1 // pred_region
      _
    $region29: #{tpu_custom_call.1} parent=1 // pred_fallthru
      _
    // Predicated region
    $region30: #{tpu_custom_call.1} parent=1 // pred_check
      _
    $region31: #{tpu_custom_call.1} parent=1 // pred_check_branch
      %29 = sbr.rel (0) target = $region33
    $region32: #{tpu_custom_call.1} parent=1 // pred_region
      _
    $region33: #{tpu_custom_call.1} parent=1 // pred_fallthru
      _
    %v30 = vld [vmem:[%s0] sm:$0xff]
    %v31 = vld [vmem:[%s0 + $0x8] sm:$0xff]
    %v32 = vld [vmem:[%s1] sm:$0xff]
    %v33 = vld [vmem:[%s1 + $0x8] sm:$0xff]
    %v34 = vld [vmem:[%s1 + $0x10] sm:$0xff]
    %v35 = vld [vmem:[%s1 + $0x18] sm:$0xff]
    %v36 = vld [vmem:[%s2] sm:$0x1]
    %v37 = vld [vmem:[%s3] sm:$0xff]
    %v38 = vld [vmem:[%s3 + $0x8] sm:$0xff]
    %v39 = vld [vmem:[%s3 + $0x10] sm:$0xff]
    %v40 = vld [vmem:[%s3 + $0x18] sm:$0xff]
    %v41 = vld [vmem:[%s4] sm:$0xff]
    %v42 = vld [vmem:[%s4 + $0x8] sm:$0xff]
    %v43 = vld [vmem:[%s4 + $0x10] sm:$0xff]
    %v44 = vld [vmem:[%s4 + $0x18] sm:$0xff]
    %v45 = vld [vmem:[%s4 + $0x20] sm:$0xff]
    %v46 = vld [vmem:[%s4 + $0x28] sm:$0xff]
    %v47 = vld [vmem:[%s4 + $0x30] sm:$0xff]
    %v48 = vld [vmem:[%s4 + $0x38] sm:$0xff]
    %v49 = vld [vmem:[%s5] sm:$0x3]
    %v50 = vld [vmem:[%s6] sm:$0xff]
    %v51 = vld [vmem:[%s6 + $0x8] sm:$0xff]
    %v52 = vld [vmem:[%s6 + $0x10] sm:$0xff]
    %v53 = vld [vmem:[%s6 + $0x18] sm:$0xff]
    %v54 = vld [vmem:[%s6 + $0x20] sm:$0xff]
    %v55 = vld [vmem:[%s6 + $0x28] sm:$0xff]
    %v56 = vld [vmem:[%s6 + $0x30] sm:$0xff]
    %v57 = vld [vmem:[%s6 + $0x38] sm:$0xff]
    %v58 = vld [vmem:[%s6 + $0x40] sm:$0xff]
    %v59 = vld [vmem:[%s6 + $0x48] sm:$0xff]
    %v60 = vld [vmem:[%s6 + $0x50] sm:$0xff]
    %v61 = vld [vmem:[%s6 + $0x58] sm:$0xff]
    %v62 = vld [vmem:[%s6 + $0x60] sm:$0xff]
    %v63 = vld [vmem:[%s6 + $0x68] sm:$0xff]
    %v64 = vld [vmem:[%s6 + $0x70] sm:$0xff]
    %v65 = vld [vmem:[%s6 + $0x78] sm:$0xff]
    %v66 = vld [vmem:[%s6 + $0x80] sm:$0xff]
    %v67 = vld [vmem:[%s6 + $0x88] sm:$0xff]
    %v68 = vld [vmem:[%s6 + $0x90] sm:$0xff]
    %v69 = vld [vmem:[%s6 + $0x98] sm:$0xff]
    %v70 = vld [vmem:[%s6 + $0xa0] sm:$0xff]
    %v71 = vld [vmem:[%s6 + $0xa8] sm:$0xff]
    %v72 = vld [vmem:[%s6 + $0xb0] sm:$0xff]
    %v73 = vld [vmem:[%s6 + $0xb8] sm:$0xff]
    %v74 = vld [vmem:[%s6 + $0xc0] sm:$0xff]
    %v75 = vld [vmem:[%s6 + $0xc8] sm:$0xff]
    %v76 = vld [vmem:[%s6 + $0xd0] sm:$0xff]
    %v77 = vld [vmem:[%s6 + $0xd8] sm:$0xff]
    %v78 = vld [vmem:[%s6 + $0xe0] sm:$0xff]
    %v79 = vld [vmem:[%s6 + $0xe8] sm:$0xff]
    %v80 = vld [vmem:[%s6 + $0xf0] sm:$0xff]
    %v81 = vld [vmem:[%s6 + $0xf8] sm:$0xff]
    %v82 = vld [vmem:[%s7] sm:$0x3f]
    %v84 = vlaneseq
    %v85 = vshrl.u32 %v84, 7
    %v86 = vsub.s32 0, %v85
    %v87 = vrot.slane %v36, %v86
    %vm89 = vcmask 261120
    %v91 = vsel %vm89, %v30, 0
    %v94 = vsel %vm89, %v31, 0
    %96 = vmatprep.subr.mxu0 0.0
    %97 = vmatpush1.msra.mxu0 %v32
    %98 = vmatprep.subr.mxu0 0.0
    %99 = vmatpush1.msra.mxu0 %v33
    %100 = vmatprep.subr.mxu0 0.0
    %101 = vmatpush1.msra.mxu0 %v34
    %102 = vmatprep.subr.mxu0 0.0
    %103 = vmatpush1.msra.mxu0 %v35
    %104 = vmatprep.subr.mxu0 0.0
    %105 = vmatpush1.msra.mxu0 0.0
    %106 = vmatprep.subr.mxu0 0.0
    %107 = vmatpush1.msra.mxu0 0.0
    %108 = vmatprep.subr.mxu0 0.0
    %109 = vmatpush1.msra.mxu0 0.0
    %110 = vmatprep.subr.mxu0 0.0
    %111 = vmatpush1.msra.mxu0 0.0
    %112 = vmatprep.subr.mxu0 0.0
    %113 = vmatpush1.msra.mxu0 0.0
    %114 = vmatprep.subr.mxu0 0.0
    %115 = vmatpush1.msra.mxu0 0.0
    %116 = vmatprep.subr.mxu0 0.0
    %117 = vmatpush1.msra.mxu0 0.0
    %118 = vmatprep.subr.mxu0 0.0
    %119 = vmatpush1.msra.mxu0 0.0
    %120 = vmatprep.subr.mxu0 0.0
    %121 = vmatpush1.msra.mxu0 0.0
    %122 = vmatprep.subr.mxu0 0.0
    %123 = vmatpush1.msra.mxu0 0.0
    %124 = vmatprep.subr.mxu0 0.0
    %125 = vmatpush1.msra.mxu0 0.0
    %126 = vmatprep.subr.mxu0 0.0
    %127 = vmatpush1.msra.mxu0 0.0
    %128 = vmatprep.subr.mxu0 0.0
    %129 = vmatpush1.msra.mxu0 0.0
    %130 = vmatprep.subr.mxu0 0.0
    %131 = vmatpush1.msra.mxu0 0.0
    %132 = vmatprep.subr.mxu0 0.0
    %133 = vmatpush1.msra.mxu0 0.0
    %134 = vmatprep.subr.mxu0 0.0
    %135 = vmatpush1.msra.mxu0 0.0
    %136 = vmatprep.subr.mxu0 0.0
    %137 = vmatpush1.msra.mxu0 0.0
    %138 = vmatprep.subr.mxu0 0.0
    %139 = vmatpush1.msra.mxu0 0.0
    %140 = vmatprep.subr.mxu0 0.0
    %141 = vmatpush1.msra.mxu0 0.0
    %142 = vmatprep.subr.mxu0 0.0
    %143 = vmatpush1.msra.mxu0 0.0
    %144 = vmatprep.subr.mxu0 0.0
    %145 = vmatpush1.msra.mxu0 0.0
    %146 = vmatprep.subr.mxu0 0.0
    %147 = vmatpush1.msra.mxu0 0.0
    %148 = vmatprep.subr.mxu0 0.0
    %149 = vmatpush1.msra.mxu0 0.0
    %150 = vmatprep.subr.mxu0 0.0
    %151 = vmatpush1.msra.mxu0 0.0
    %152 = vmatprep.subr.mxu0 0.0
    %153 = vmatpush1.msra.mxu0 0.0
    %154 = vmatprep.subr.mxu0 0.0
    %155 = vmatpush1.msra.mxu0 0.0
    %156 = vmatprep.subr.mxu0 0.0
    %157 = vmatpush1.msra.mxu0 0.0
    %158 = vmatprep.subr.mxu0 0.0
    %159 = vmatpush1.msra.mxu0 0.0
    %160 = vmatprep.mubr.f32.mxu0 0.0
    %161 = vmatmul.mubr.f32.gmra.mrb[0].mxu0 %v91
    %v162 = vpop.f32.mrb[0].mxu0
    %v163 = vadd.f32 %v87, %v162
    %v164 = vpop.f32.mrb[0].mxu0
    %165 = vmatprep.mubr.f32.mxu0 0.0
    %166 = vmatmul.mubr.f32.gmra.mrb[0].mxu0 %v94
    %v167 = vpop.f32.mrb[0].mxu0
    %v168 = vadd.f32 %v87, %v167
    %v169 = vpop.f32.mrb[0].mxu0
    %170 = vdwg.mxu0
    %172 = vrot.lane.b32.xlu0 %v163, 96
    %v173 = vpop.permute.xlu0 %172
    %vm174 = vcmask 64512
    %v175 = vsel %vm174, %v163, 0
    %v177 = vsel %vm174, %v173, 0
    %179 = vmatprep.subr.mxu0 0.0
    %180 = vmatpush1.xpose.msra.mxu0 %v177
    %181 = vmatprep.subr.mxu0 0.0
    %182 = vmatpush1.xpose.msra.mxu0 0.0
    %183 = vmatprep.subr.mxu0 0.0
    %184 = vmatpush1.xpose.msra.mxu0 0.0
    %185 = vmatprep.subr.mxu0 0.0
    %186 = vmatpush1.xpose.msra.mxu0 0.0
    %187 = vmatprep.subr.mxu0 0.0
    %188 = vmatpush1.xpose.msra.mxu0 0.0
    %189 = vmatprep.subr.mxu0 0.0
    %190 = vmatpush1.xpose.msra.mxu0 0.0
    %191 = vmatprep.subr.mxu0 0.0
    %192 = vmatpush1.xpose.msra.mxu0 0.0
    %193 = vmatprep.subr.mxu0 0.0
    %194 = vmatpush1.xpose.msra.mxu0 0.0
    %195 = vmatprep.subr.mxu0 0.0
    %196 = vmatpush1.xpose.msra.mxu0 0.0
    %197 = vmatprep.subr.mxu0 0.0
    %198 = vmatpush1.xpose.msra.mxu0 0.0
    %199 = vmatprep.subr.mxu0 0.0
    %200 = vmatpush1.xpose.msra.mxu0 0.0
    %201 = vmatprep.subr.mxu0 0.0
    %202 = vmatpush1.xpose.msra.mxu0 0.0
    %203 = vmatprep.subr.mxu0 0.0
    %204 = vmatpush1.xpose.msra.mxu0 0.0
    %205 = vmatprep.subr.mxu0 0.0
    %206 = vmatpush1.xpose.msra.mxu0 0.0
    %207 = vmatprep.subr.mxu0 0.0
    %208 = vmatpush1.xpose.msra.mxu0 0.0
    %209 = vmatprep.subr.mxu0 0.0
    %210 = vmatpush1.xpose.msra.mxu0 0.0
    %211 = vmatprep.subr.mxu0 0.0
    %212 = vmatpush1.xpose.msra.mxu0 0.0
    %213 = vmatprep.subr.mxu0 0.0
    %214 = vmatpush1.xpose.msra.mxu0 0.0
    %215 = vmatprep.subr.mxu0 0.0
    %216 = vmatpush1.xpose.msra.mxu0 0.0
    %217 = vmatprep.subr.mxu0 0.0
    %218 = vmatpush1.xpose.msra.mxu0 0.0
    %219 = vmatprep.subr.mxu0 0.0
    %220 = vmatpush1.xpose.msra.mxu0 0.0
    %221 = vmatprep.subr.mxu0 0.0
    %222 = vmatpush1.xpose.msra.mxu0 0.0
    %223 = vmatprep.subr.mxu0 0.0
    %224 = vmatpush1.xpose.msra.mxu0 0.0
    %225 = vmatprep.subr.mxu0 0.0
    %226 = vmatpush1.xpose.msra.mxu0 0.0
    %227 = vmatprep.subr.mxu0 0.0
    %228 = vmatpush1.xpose.msra.mxu0 0.0
    %229 = vmatprep.subr.mxu0 0.0
    %230 = vmatpush1.xpose.msra.mxu0 0.0
    %231 = vmatprep.subr.mxu0 0.0
    %232 = vmatpush1.xpose.msra.mxu0 0.0
    %233 = vmatprep.subr.mxu0 0.0
    %234 = vmatpush1.xpose.msra.mxu0 0.0
    %235 = vmatprep.subr.mxu0 0.0
    %236 = vmatpush1.xpose.msra.mxu0 0.0
    %237 = vmatprep.subr.mxu0 0.0
    %238 = vmatpush1.xpose.msra.mxu0 0.0
    %239 = vmatprep.subr.mxu0 0.0
    %240 = vmatpush1.xpose.msra.mxu0 0.0
    %241 = vmatprep.subr.mxu0 0.0
    %242 = vmatpush1.xpose.msra.mxu0 0.0
    %243 = vmatprep.mubr.f32.mxu0 0.0
    %244 = vmatmul.mubr.f32.gmra.mrb[0].mxu0 %v175
    %v245 = vpop.f32.mrb[0].mxu0
    %v246 = vadd.f32 0.0, %v245
    %v247 = vpop.f32.mrb[0].mxu0
    %248 = vdwg.mxu0
    %v249 = vsel %vm174, %v246, -inf
    %250 = vmax.xlane.f32.xlu0 %v249
    %v251 = vpop.xlane.xlu0 %250
    %v252 = vsub.f32 %v246, %v251
    %v253 = vmul.f32 %v252, 1.442695
    %v254 = vpow.pop %v253
    %v255 = vsel %vm174, %v254, 0.0
    %256 = vadd.xlane.f32.xlu0 %v255
    %v257 = vpop.xlane.xlu0 %256
    %v258 = vrcp.pop %v257
    %259 = vrot.lane.b32.xlu0 %v163, 64
    %v260 = vpop.permute.xlu0 %259
    %v263 = vsel %vm174, %v254, 0
    %265 = vmatprep.subr.mxu0 0.0
    %266 = vmatpush1.msra.mxu0 %v260
    %267 = vmatprep.subr.mxu0 0.0
    %268 = vmatpush1.msra.mxu0 0.0
    %269 = vmatprep.subr.mxu0 0.0
    %270 = vmatpush1.msra.mxu0 0.0
    %271 = vmatprep.subr.mxu0 0.0
    %272 = vmatpush1.msra.mxu0 0.0
    %273 = vmatprep.subr.mxu0 0.0
    %274 = vmatpush1.msra.mxu0 0.0
    %275 = vmatprep.subr.mxu0 0.0
    %276 = vmatpush1.msra.mxu0 0.0
    %277 = vmatprep.subr.mxu0 0.0
    %278 = vmatpush1.msra.mxu0 0.0
    %279 = vmatprep.subr.mxu0 0.0
    %280 = vmatpush1.msra.mxu0 0.0
    %281 = vmatprep.subr.mxu0 0.0
    %282 = vmatpush1.msra.mxu0 0.0
    %283 = vmatprep.subr.mxu0 0.0
    %284 = vmatpush1.msra.mxu0 0.0
    %285 = vmatprep.subr.mxu0 0.0
    %286 = vmatpush1.msra.mxu0 0.0
    %287 = vmatprep.subr.mxu0 0.0
    %288 = vmatpush1.msra.mxu0 0.0
    %289 = vmatprep.subr.mxu0 0.0
    %290 = vmatpush1.msra.mxu0 0.0
    %291 = vmatprep.subr.mxu0 0.0
    %292 = vmatpush1.msra.mxu0 0.0
    %293 = vmatprep.subr.mxu0 0.0
    %294 = vmatpush1.msra.mxu0 0.0
    %295 = vmatprep.subr.mxu0 0.0
    %296 = vmatpush1.msra.mxu0 0.0
    %297 = vmatprep.subr.mxu0 0.0
    %298 = vmatpush1.msra.mxu0 0.0
    %299 = vmatprep.subr.mxu0 0.0
    %300 = vmatpush1.msra.mxu0 0.0
    %301 = vmatprep.subr.mxu0 0.0
    %302 = vmatpush1.msra.mxu0 0.0
    %303 = vmatprep.subr.mxu0 0.0
    %304 = vmatpush1.msra.mxu0 0.0
    %305 = vmatprep.subr.mxu0 0.0
    %306 = vmatpush1.msra.mxu0 0.0
    %307 = vmatprep.subr.mxu0 0.0
    %308 = vmatpush1.msra.mxu0 0.0
    %309 = vmatprep.subr.mxu0 0.0
    %310 = vmatpush1.msra.mxu0 0.0
    %311 = vmatprep.subr.mxu0 0.0
    %312 = vmatpush1.msra.mxu0 0.0
    %313 = vmatprep.subr.mxu0 0.0
    %314 = vmatpush1.msra.mxu0 0.0
    %315 = vmatprep.subr.mxu0 0.0
    %316 = vmatpush1.msra.mxu0 0.0
    %317 = vmatprep.subr.mxu0 0.0
    %318 = vmatpush1.msra.mxu0 0.0
    %319 = vmatprep.subr.mxu0 0.0
    %320 = vmatpush1.msra.mxu0 0.0
    %321 = vmatprep.subr.mxu0 0.0
    %322 = vmatpush1.msra.mxu0 0.0
    %323 = vmatprep.subr.mxu0 0.0
    %324 = vmatpush1.msra.mxu0 0.0
    %325 = vmatprep.subr.mxu0 0.0
    %326 = vmatpush1.msra.mxu0 0.0
    %327 = vmatprep.subr.mxu0 0.0
    %328 = vmatpush1.msra.mxu0 0.0
    %329 = vmatprep.mubr.f32.mxu0 0.0
    %330 = vmatmul.mubr.f32.gmra.mrb[0].mxu0 %v263
    %v331 = vpop.f32.mrb[0].mxu0
    %v332 = vadd.f32 0.0, %v331
    %v333 = vpop.f32.mrb[0].mxu0
    %334 = vdwg.mxu0
    %v335 = vmul.f32 %v332, %v258
    %336 = vrot.lane.b32.xlu0 %v163, 120
    %v337 = vpop.permute.xlu0 %336
    %338 = vrot.lane.b32.xlu0 %v163, 88
    %v339 = vpop.permute.xlu0 %338
    %v340 = vsel %vm174, %v337, 0
    %v342 = vsel %vm174, %v339, 0
    %344 = vmatprep.subr.mxu0 0.0
    %345 = vmatpush1.xpose.msra.mxu0 %v342
    %346 = vmatprep.subr.mxu0 0.0
    %347 = vmatpush1.xpose.msra.mxu0 0.0
    %348 = vmatprep.subr.mxu0 0.0
    %349 = vmatpush1.xpose.msra.mxu0 0.0
    %350 = vmatprep.subr.mxu0 0.0
    %351 = vmatpush1.xpose.msra.mxu0 0.0
    %352 = vmatprep.subr.mxu0 0.0
    %353 = vmatpush1.xpose.msra.mxu0 0.0
    %354 = vmatprep.subr.mxu0 0.0
    %355 = vmatpush1.xpose.msra.mxu0 0.0
    %356 = vmatprep.subr.mxu0 0.0
    %357 = vmatpush1.xpose.msra.mxu0 0.0
    %358 = vmatprep.subr.mxu0 0.0
    %359 = vmatpush1.xpose.msra.mxu0 0.0
    %360 = vmatprep.subr.mxu0 0.0
    %361 = vmatpush1.xpose.msra.mxu0 0.0
    %362 = vmatprep.subr.mxu0 0.0
    %363 = vmatpush1.xpose.msra.mxu0 0.0
    %364 = vmatprep.subr.mxu0 0.0
    %365 = vmatpush1.xpose.msra.mxu0 0.0
    %366 = vmatprep.subr.mxu0 0.0
    %367 = vmatpush1.xpose.msra.mxu0 0.0
    %368 = vmatprep.subr.mxu0 0.0
    %369 = vmatpush1.xpose.msra.mxu0 0.0
    %370 = vmatprep.subr.mxu0 0.0
    %371 = vmatpush1.xpose.msra.mxu0 0.0
    %372 = vmatprep.subr.mxu0 0.0
    %373 = vmatpush1.xpose.msra.mxu0 0.0
    %374 = vmatprep.subr.mxu0 0.0
    %375 = vmatpush1.xpose.msra.mxu0 0.0
    %376 = vmatprep.subr.mxu0 0.0
    %377 = vmatpush1.xpose.msra.mxu0 0.0
    %378 = vmatprep.subr.mxu0 0.0
    %379 = vmatpush1.xpose.msra.mxu0 0.0
    %380 = vmatprep.subr.mxu0 0.0
    %381 = vmatpush1.xpose.msra.mxu0 0.0
    %382 = vmatprep.subr.mxu0 0.0
    %383 = vmatpush1.xpose.msra.mxu0 0.0
    %384 = vmatprep.subr.mxu0 0.0
    %385 = vmatpush1.xpose.msra.mxu0 0.0
    %386 = vmatprep.subr.mxu0 0.0
    %387 = vmatpush1.xpose.msra.mxu0 0.0
    %388 = vmatprep.subr.mxu0 0.0
    %389 = vmatpush1.xpose.msra.mxu0 0.0
    %390 = vmatprep.subr.mxu0 0.0
    %391 = vmatpush1.xpose.msra.mxu0 0.0
    %392 = vmatprep.subr.mxu0 0.0
    %393 = vmatpush1.xpose.msra.mxu0 0.0
    %394 = vmatprep.subr.mxu0 0.0
    %395 = vmatpush1.xpose.msra.mxu0 0.0
    %396 = vmatprep.subr.mxu0 0.0
    %397 = vmatpush1.xpose.msra.mxu0 0.0
    %398 = vmatprep.subr.mxu0 0.0
    %399 = vmatpush1.xpose.msra.mxu0 0.0
    %400 = vmatprep.subr.mxu0 0.0
    %401 = vmatpush1.xpose.msra.mxu0 0.0
    %402 = vmatprep.subr.mxu0 0.0
    %403 = vmatpush1.xpose.msra.mxu0 0.0
    %404 = vmatprep.subr.mxu0 0.0
    %405 = vmatpush1.xpose.msra.mxu0 0.0
    %406 = vmatprep.subr.mxu0 0.0
    %407 = vmatpush1.xpose.msra.mxu0 0.0
    %408 = vmatprep.mubr.f32.mxu0 0.0
    %409 = vmatmul.mubr.f32.gmra.mrb[0].mxu0 %v340
    %v410 = vpop.f32.mrb[0].mxu0
    %v411 = vadd.f32 0.0, %v410
    %v412 = vpop.f32.mrb[0].mxu0
    %413 = vdwg.mxu0
    %v414 = vsel %vm174, %v411, -inf
    %415 = vmax.xlane.f32.xlu0 %v414
    %v416 = vpop.xlane.xlu0 %415
    %v417 = vsub.f32 %v411, %v416
    %v418 = vmul.f32 %v417, 1.442695
    %v419 = vpow.pop %v418
    %v420 = vsel %vm174, %v419, 0.0
    %421 = vadd.xlane.f32.xlu0 %v420
    %v422 = vpop.xlane.xlu0 %421
    %v423 = vrcp.pop %v422
    %424 = vrot.lane.b32.xlu0 %v163, 56
    %v425 = vpop.permute.xlu0 %424
    %v428 = vsel %vm174, %v419, 0
    %430 = vmatprep.subr.mxu0 0.0
    %431 = vmatpush1.msra.mxu0 %v425
    %432 = vmatprep.subr.mxu0 0.0
    %433 = vmatpush1.msra.mxu0 0.0
    %434 = vmatprep.subr.mxu0 0.0
    %435 = vmatpush1.msra.mxu0 0.0
    %436 = vmatprep.subr.mxu0 0.0
    %437 = vmatpush1.msra.mxu0 0.0
    %438 = vmatprep.subr.mxu0 0.0
    %439 = vmatpush1.msra.mxu0 0.0
    %440 = vmatprep.subr.mxu0 0.0
    %441 = vmatpush1.msra.mxu0 0.0
    %442 = vmatprep.subr.mxu0 0.0
    %443 = vmatpush1.msra.mxu0 0.0
    %444 = vmatprep.subr.mxu0 0.0
    %445 = vmatpush1.msra.mxu0 0.0
    %446 = vmatprep.subr.mxu0 0.0
    %447 = vmatpush1.msra.mxu0 0.0
    %448 = vmatprep.subr.mxu0 0.0
    %449 = vmatpush1.msra.mxu0 0.0
    %450 = vmatprep.subr.mxu0 0.0
    %451 = vmatpush1.msra.mxu0 0.0
    %452 = vmatprep.subr.mxu0 0.0
    %453 = vmatpush1.msra.mxu0 0.0
    %454 = vmatprep.subr.mxu0 0.0
    %455 = vmatpush1.msra.mxu0 0.0
    %456 = vmatprep.subr.mxu0 0.0
    %457 = vmatpush1.msra.mxu0 0.0
    %458 = vmatprep.subr.mxu0 0.0
    %459 = vmatpush1.msra.mxu0 0.0
    %460 = vmatprep.subr.mxu0 0.0
    %461 = vmatpush1.msra.mxu0 0.0
    %462 = vmatprep.subr.mxu0 0.0
    %463 = vmatpush1.msra.mxu0 0.0
    %464 = vmatprep.subr.mxu0 0.0
    %465 = vmatpush1.msra.mxu0 0.0
    %466 = vmatprep.subr.mxu0 0.0
    %467 = vmatpush1.msra.mxu0 0.0
    %468 = vmatprep.subr.mxu0 0.0
    %469 = vmatpush1.msra.mxu0 0.0
    %470 = vmatprep.subr.mxu0 0.0
    %471 = vmatpush1.msra.mxu0 0.0
    %472 = vmatprep.subr.mxu0 0.0
    %473 = vmatpush1.msra.mxu0 0.0
    %474 = vmatprep.subr.mxu0 0.0
    %475 = vmatpush1.msra.mxu0 0.0
    %476 = vmatprep.subr.mxu0 0.0
    %477 = vmatpush1.msra.mxu0 0.0
    %478 = vmatprep.subr.mxu0 0.0
    %479 = vmatpush1.msra.mxu0 0.0
    %480 = vmatprep.subr.mxu0 0.0
    %481 = vmatpush1.msra.mxu0 0.0
    %482 = vmatprep.subr.mxu0 0.0
    %483 = vmatpush1.msra.mxu0 0.0
    %484 = vmatprep.subr.mxu0 0.0
    %485 = vmatpush1.msra.mxu0 0.0
    %486 = vmatprep.subr.mxu0 0.0
    %487 = vmatpush1.msra.mxu0 0.0
    %488 = vmatprep.subr.mxu0 0.0
    %489 = vmatpush1.msra.mxu0 0.0
    %490 = vmatprep.subr.mxu0 0.0
    %491 = vmatpush1.msra.mxu0 0.0
    %492 = vmatprep.subr.mxu0 0.0
    %493 = vmatpush1.msra.mxu0 0.0
    %494 = vmatprep.mubr.f32.mxu0 0.0
    %495 = vmatmul.mubr.f32.gmra.mrb[0].mxu0 %v428
    %v496 = vpop.f32.mrb[0].mxu0
    %v497 = vadd.f32 0.0, %v496
    %v498 = vpop.f32.mrb[0].mxu0
    %499 = vdwg.mxu0
    %v500 = vmul.f32 %v497, %v423
    %v502 = vsel %vm174, %v500, 0
    %504 = vmatprep.subr.mxu0 0.0
    %505 = vmatpush1.msra.mxu0 %v38
    %506 = vmatprep.subr.mxu0 0.0
    %507 = vmatpush1.msra.mxu0 0.0
    %508 = vmatprep.subr.mxu0 0.0
    %509 = vmatpush1.msra.mxu0 0.0
    %510 = vmatprep.subr.mxu0 0.0
    %511 = vmatpush1.msra.mxu0 0.0
    %512 = vmatprep.subr.mxu0 0.0
    %513 = vmatpush1.msra.mxu0 0.0
    %514 = vmatprep.subr.mxu0 0.0
    %515 = vmatpush1.msra.mxu0 0.0
    %516 = vmatprep.subr.mxu0 0.0
    %517 = vmatpush1.msra.mxu0 0.0
    %518 = vmatprep.subr.mxu0 0.0
    %519 = vmatpush1.msra.mxu0 0.0
    %520 = vmatprep.subr.mxu0 0.0
    %521 = vmatpush1.msra.mxu0 0.0
    %522 = vmatprep.subr.mxu0 0.0
    %523 = vmatpush1.msra.mxu0 0.0
    %524 = vmatprep.subr.mxu0 0.0
    %525 = vmatpush1.msra.mxu0 0.0
    %526 = vmatprep.subr.mxu0 0.0
    %527 = vmatpush1.msra.mxu0 0.0
    %528 = vmatprep.subr.mxu0 0.0
    %529 = vmatpush1.msra.mxu0 0.0
    %530 = vmatprep.subr.mxu0 0.0
    %531 = vmatpush1.msra.mxu0 0.0
    %532 = vmatprep.subr.mxu0 0.0
    %533 = vmatpush1.msra.mxu0 0.0
    %534 = vmatprep.subr.mxu0 0.0
    %535 = vmatpush1.msra.mxu0 0.0
    %536 = vmatprep.subr.mxu0 0.0
    %537 = vmatpush1.msra.mxu0 0.0
    %538 = vmatprep.subr.mxu0 0.0
    %539 = vmatpush1.msra.mxu0 0.0
    %540 = vmatprep.subr.mxu0 0.0
    %541 = vmatpush1.msra.mxu0 0.0
    %542 = vmatprep.subr.mxu0 0.0
    %543 = vmatpush1.msra.mxu0 0.0
    %544 = vmatprep.subr.mxu0 0.0
    %545 = vmatpush1.msra.mxu0 0.0
    %546 = vmatprep.subr.mxu0 0.0
    %547 = vmatpush1.msra.mxu0 0.0
    %548 = vmatprep.subr.mxu0 0.0
    %549 = vmatpush1.msra.mxu0 0.0
    %550 = vmatprep.subr.mxu0 0.0
    %551 = vmatpush1.msra.mxu0 0.0
    %552 = vmatprep.subr.mxu0 0.0
    %553 = vmatpush1.msra.mxu0 0.0
    %554 = vmatprep.subr.mxu0 0.0
    %555 = vmatpush1.msra.mxu0 0.0
    %556 = vmatprep.subr.mxu0 0.0
    %557 = vmatpush1.msra.mxu0 0.0
    %558 = vmatprep.subr.mxu0 0.0
    %559 = vmatpush1.msra.mxu0 0.0
    %560 = vmatprep.subr.mxu0 0.0
    %561 = vmatpush1.msra.mxu0 0.0
    %562 = vmatprep.subr.mxu0 0.0
    %563 = vmatpush1.msra.mxu0 0.0
    %564 = vmatprep.subr.mxu0 0.0
    %565 = vmatpush1.msra.mxu0 0.0
    %566 = vmatprep.subr.mxu0 0.0
    %567 = vmatpush1.msra.mxu0 0.0
    %568 = vmatprep.mubr.f32.mxu0 0.0
    %569 = vmatmul.mubr.f32.gmra.mrb[0].mxu0 %v502
    %v570 = vpop.f32.mrb[0].mxu0
    %v571 = vadd.f32 0.0, %v570
    %v572 = vpop.f32.mrb[0].mxu0
    %573 = vdwg.mxu0
    %v575 = vsel %vm174, %v335, 0
    %577 = vmatprep.subr.mxu0 0.0
    %578 = vmatpush1.msra.mxu0 %v37
    %579 = vmatprep.subr.mxu0 0.0
    %580 = vmatpush1.msra.mxu0 0.0
    %581 = vmatprep.subr.mxu0 0.0
    %582 = vmatpush1.msra.mxu0 0.0
    %583 = vmatprep.subr.mxu0 0.0
    %584 = vmatpush1.msra.mxu0 0.0
    %585 = vmatprep.subr.mxu0 0.0
    %586 = vmatpush1.msra.mxu0 0.0
    %587 = vmatprep.subr.mxu0 0.0
    %588 = vmatpush1.msra.mxu0 0.0
    %589 = vmatprep.subr.mxu0 0.0
    %590 = vmatpush1.msra.mxu0 0.0
    %591 = vmatprep.subr.mxu0 0.0
    %592 = vmatpush1.msra.mxu0 0.0
    %593 = vmatprep.subr.mxu0 0.0
    %594 = vmatpush1.msra.mxu0 0.0
    %595 = vmatprep.subr.mxu0 0.0
    %596 = vmatpush1.msra.mxu0 0.0
    %597 = vmatprep.subr.mxu0 0.0
    %598 = vmatpush1.msra.mxu0 0.0
    %599 = vmatprep.subr.mxu0 0.0
    %600 = vmatpush1.msra.mxu0 0.0
    %601 = vmatprep.subr.mxu0 0.0
    %602 = vmatpush1.msra.mxu0 0.0
    %603 = vmatprep.subr.mxu0 0.0
    %604 = vmatpush1.msra.mxu0 0.0
    %605 = vmatprep.subr.mxu0 0.0
    %606 = vmatpush1.msra.mxu0 0.0
    %607 = vmatprep.subr.mxu0 0.0
    %608 = vmatpush1.msra.mxu0 0.0
    %609 = vmatprep.subr.mxu0 0.0
    %610 = vmatpush1.msra.mxu0 0.0
    %611 = vmatprep.subr.mxu0 0.0
    %612 = vmatpush1.msra.mxu0 0.0
    %613 = vmatprep.subr.mxu0 0.0
    %614 = vmatpush1.msra.mxu0 0.0
    %615 = vmatprep.subr.mxu0 0.0
    %616 = vmatpush1.msra.mxu0 0.0
    %617 = vmatprep.subr.mxu0 0.0
    %618 = vmatpush1.msra.mxu0 0.0
    %619 = vmatprep.subr.mxu0 0.0
    %620 = vmatpush1.msra.mxu0 0.0
    %621 = vmatprep.subr.mxu0 0.0
    %622 = vmatpush1.msra.mxu0 0.0
    %623 = vmatprep.subr.mxu0 0.0
    %624 = vmatpush1.msra.mxu0 0.0
    %625 = vmatprep.subr.mxu0 0.0
    %626 = vmatpush1.msra.mxu0 0.0
    %627 = vmatprep.subr.mxu0 0.0
    %628 = vmatpush1.msra.mxu0 0.0
    %629 = vmatprep.subr.mxu0 0.0
    %630 = vmatpush1.msra.mxu0 0.0
    %631 = vmatprep.subr.mxu0 0.0
    %632 = vmatpush1.msra.mxu0 0.0
    %633 = vmatprep.subr.mxu0 0.0
    %634 = vmatpush1.msra.mxu0 0.0
    %635 = vmatprep.subr.mxu0 0.0
    %636 = vmatpush1.msra.mxu0 0.0
    %637 = vmatprep.subr.mxu0 0.0
    %638 = vmatpush1.msra.mxu0 0.0
    %639 = vmatprep.subr.mxu0 0.0
    %640 = vmatpush1.msra.mxu0 0.0
    %641 = vmatprep.mubr.f32.mxu0 0.0
    %642 = vmatmul.mubr.f32.gmra.mrb[0].mxu0 %v575
    %v643 = vpop.f32.mrb[0].mxu0
    %v644 = vadd.f32 %v571, %v643
    %v645 = vpop.f32.mrb[0].mxu0
    %646 = vdwg.mxu0
    %647 = vrot.lane.b32.xlu0 %v163, 112
    %v648 = vpop.permute.xlu0 %647
    %649 = vrot.lane.b32.xlu0 %v163, 80
    %v650 = vpop.permute.xlu0 %649
    %v651 = vsel %vm174, %v648, 0
    %v653 = vsel %vm174, %v650, 0
    %655 = vmatprep.subr.mxu0 0.0
    %656 = vmatpush1.xpose.msra.mxu0 %v653
    %657 = vmatprep.subr.mxu0 0.0
    %658 = vmatpush1.xpose.msra.mxu0 0.0
    %659 = vmatprep.subr.mxu0 0.0
    %660 = vmatpush1.xpose.msra.mxu0 0.0
    %661 = vmatprep.subr.mxu0 0.0
    %662 = vmatpush1.xpose.msra.mxu0 0.0
    %663 = vmatprep.subr.mxu0 0.0
    %664 = vmatpush1.xpose.msra.mxu0 0.0
    %665 = vmatprep.subr.mxu0 0.0
    %666 = vmatpush1.xpose.msra.mxu0 0.0
    %667 = vmatprep.subr.mxu0 0.0
    %668 = vmatpush1.xpose.msra.mxu0 0.0
    %669 = vmatprep.subr.mxu0 0.0
    %670 = vmatpush1.xpose.msra.mxu0 0.0
    %671 = vmatprep.subr.mxu0 0.0
    %672 = vmatpush1.xpose.msra.mxu0 0.0
    %673 = vmatprep.subr.mxu0 0.0
    %674 = vmatpush1.xpose.msra.mxu0 0.0
    %675 = vmatprep.subr.mxu0 0.0
    %676 = vmatpush1.xpose.msra.mxu0 0.0
    %677 = vmatprep.subr.mxu0 0.0
    %678 = vmatpush1.xpose.msra.mxu0 0.0
    %679 = vmatprep.subr.mxu0 0.0
    %680 = vmatpush1.xpose.msra.mxu0 0.0
    %681 = vmatprep.subr.mxu0 0.0
    %682 = vmatpush1.xpose.msra.mxu0 0.0
    %683 = vmatprep.subr.mxu0 0.0
    %684 = vmatpush1.xpose.msra.mxu0 0.0
    %685 = vmatprep.subr.mxu0 0.0
    %686 = vmatpush1.xpose.msra.mxu0 0.0
    %687 = vmatprep.subr.mxu0 0.0
    %688 = vmatpush1.xpose.msra.mxu0 0.0
    %689 = vmatprep.subr.mxu0 0.0
    %690 = vmatpush1.xpose.msra.mxu0 0.0
    %691 = vmatprep.subr.mxu0 0.0
    %692 = vmatpush1.xpose.msra.mxu0 0.0
    %693 = vmatprep.subr.mxu0 0.0
    %694 = vmatpush1.xpose.msra.mxu0 0.0
    %695 = vmatprep.subr.mxu0 0.0
    %696 = vmatpush1.xpose.msra.mxu0 0.0
    %697 = vmatprep.subr.mxu0 0.0
    %698 = vmatpush1.xpose.msra.mxu0 0.0
    %699 = vmatprep.subr.mxu0 0.0
    %700 = vmatpush1.xpose.msra.mxu0 0.0
    %701 = vmatprep.subr.mxu0 0.0
    %702 = vmatpush1.xpose.msra.mxu0 0.0
    %703 = vmatprep.subr.mxu0 0.0
    %704 = vmatpush1.xpose.msra.mxu0 0.0
    %705 = vmatprep.subr.mxu0 0.0
    %706 = vmatpush1.xpose.msra.mxu0 0.0
    %707 = vmatprep.subr.mxu0 0.0
    %708 = vmatpush1.xpose.msra.mxu0 0.0
    %709 = vmatprep.subr.mxu0 0.0
    %710 = vmatpush1.xpose.msra.mxu0 0.0
    %711 = vmatprep.subr.mxu0 0.0
    %712 = vmatpush1.xpose.msra.mxu0 0.0
    %713 = vmatprep.subr.mxu0 0.0
    %714 = vmatpush1.xpose.msra.mxu0 0.0
    %715 = vmatprep.subr.mxu0 0.0
    %716 = vmatpush1.xpose.msra.mxu0 0.0
    %717 = vmatprep.subr.mxu0 0.0
    %718 = vmatpush1.xpose.msra.mxu0 0.0
    %719 = vmatprep.mubr.f32.mxu0 0.0
    %720 = vmatmul.mubr.f32.gmra.mrb[0].mxu0 %v651
    %v721 = vpop.f32.mrb[0].mxu0
    %v722 = vadd.f32 0.0, %v721
    %v723 = vpop.f32.mrb[0].mxu0
    %724 = vdwg.mxu0
    %v725 = vsel %vm174, %v722, -inf
    %726 = vmax.xlane.f32.xlu0 %v725
    %v727 = vpop.xlane.xlu0 %726
    %v728 = vsub.f32 %v722, %v727
    %v729 = vmul.f32 %v728, 1.442695
    %v730 = vpow.pop %v729
    %v731 = vsel %vm174, %v730, 0.0
    %732 = vadd.xlane.f32.xlu0 %v731
    %v733 = vpop.xlane.xlu0 %732
    %v734 = vrcp.pop %v733
    %735 = vrot.lane.b32.xlu0 %v163, 48
    %v736 = vpop.permute.xlu0 %735
    %v739 = vsel %vm174, %v730, 0
    %741 = vmatprep.subr.mxu0 0.0
    %742 = vmatpush1.msra.mxu0 %v736
    %743 = vmatprep.subr.mxu0 0.0
    %744 = vmatpush1.msra.mxu0 0.0
    %745 = vmatprep.subr.mxu0 0.0
    %746 = vmatpush1.msra.mxu0 0.0
    %747 = vmatprep.subr.mxu0 0.0
    %748 = vmatpush1.msra.mxu0 0.0
    %749 = vmatprep.subr.mxu0 0.0
    %750 = vmatpush1.msra.mxu0 0.0
    %751 = vmatprep.subr.mxu0 0.0
    %752 = vmatpush1.msra.mxu0 0.0
    %753 = vmatprep.subr.mxu0 0.0
    %754 = vmatpush1.msra.mxu0 0.0
    %755 = vmatprep.subr.mxu0 0.0
    %756 = vmatpush1.msra.mxu0 0.0
    %757 = vmatprep.subr.mxu0 0.0
    %758 = vmatpush1.msra.mxu0 0.0
    %759 = vmatprep.subr.mxu0 0.0
    %760 = vmatpush1.msra.mxu0 0.0
    %761 = vmatprep.subr.mxu0 0.0
    %762 = vmatpush1.msra.mxu0 0.0
    %763 = vmatprep.subr.mxu0 0.0
    %764 = vmatpush1.msra.mxu0 0.0
    %765 = vmatprep.subr.mxu0 0.0
    %766 = vmatpush1.msra.mxu0 0.0
    %767 = vmatprep.subr.mxu0 0.0
    %768 = vmatpush1.msra.mxu0 0.0
    %769 = vmatprep.subr.mxu0 0.0
    %770 = vmatpush1.msra.mxu0 0.0
    %771 = vmatprep.subr.mxu0 0.0
    %772 = vmatpush1.msra.mxu0 0.0
    %773 = vmatprep.subr.mxu0 0.0
    %774 = vmatpush1.msra.mxu0 0.0
    %775 = vmatprep.subr.mxu0 0.0
    %776 = vmatpush1.msra.mxu0 0.0
    %777 = vmatprep.subr.mxu0 0.0
    %778 = vmatpush1.msra.mxu0 0.0
    %779 = vmatprep.subr.mxu0 0.0
    %780 = vmatpush1.msra.mxu0 0.0
    %781 = vmatprep.subr.mxu0 0.0
    %782 = vmatpush1.msra.mxu0 0.0
    %783 = vmatprep.subr.mxu0 0.0
    %784 = vmatpush1.msra.mxu0 0.0
    %785 = vmatprep.subr.mxu0 0.0
    %786 = vmatpush1.msra.mxu0 0.0
    %787 = vmatprep.subr.mxu0 0.0
    %788 = vmatpush1.msra.mxu0 0.0
    %789 = vmatprep.subr.mxu0 0.0
    %790 = vmatpush1.msra.mxu0 0.0
    %791 = vmatprep.subr.mxu0 0.0
    %792 = vmatpush1.msra.mxu0 0.0
    %793 = vmatprep.subr.mxu0 0.0
    %794 = vmatpush1.msra.mxu0 0.0
    %795 = vmatprep.subr.mxu0 0.0
    %796 = vmatpush1.msra.mxu0 0.0
    %797 = vmatprep.subr.mxu0 0.0
    %798 = vmatpush1.msra.mxu0 0.0
    %799 = vmatprep.subr.mxu0 0.0
    %800 = vmatpush1.msra.mxu0 0.0
    %801 = vmatprep.subr.mxu0 0.0
    %802 = vmatpush1.msra.mxu0 0.0
    %803 = vmatprep.subr.mxu0 0.0
    %804 = vmatpush1.msra.mxu0 0.0
    %805 = vmatprep.mubr.f32.mxu0 0.0
    %806 = vmatmul.mubr.f32.gmra.mrb[0].mxu0 %v739
    %v807 = vpop.f32.mrb[0].mxu0
    %v808 = vadd.f32 0.0, %v807
    %v809 = vpop.f32.mrb[0].mxu0
    %810 = vdwg.mxu0
    %v811 = vmul.f32 %v808, %v734
    %v813 = vsel %vm174, %v811, 0
    %815 = vmatprep.subr.mxu0 0.0
    %816 = vmatpush1.msra.mxu0 %v39
    %817 = vmatprep.subr.mxu0 0.0
    %818 = vmatpush1.msra.mxu0 0.0
    %819 = vmatprep.subr.mxu0 0.0
    %820 = vmatpush1.msra.mxu0 0.0
    %821 = vmatprep.subr.mxu0 0.0
    %822 = vmatpush1.msra.mxu0 0.0
    %823 = vmatprep.subr.mxu0 0.0
    %824 = vmatpush1.msra.mxu0 0.0
    %825 = vmatprep.subr.mxu0 0.0
    %826 = vmatpush1.msra.mxu0 0.0
    %827 = vmatprep.subr.mxu0 0.0
    %828 = vmatpush1.msra.mxu0 0.0
    %829 = vmatprep.subr.mxu0 0.0
    %830 = vmatpush1.msra.mxu0 0.0
    %831 = vmatprep.subr.mxu0 0.0
    %832 = vmatpush1.msra.mxu0 0.0
    %833 = vmatprep.subr.mxu0 0.0
    %834 = vmatpush1.msra.mxu0 0.0
    %835 = vmatprep.subr.mxu0 0.0
    %836 = vmatpush1.msra.mxu0 0.0
    %837 = vmatprep.subr.mxu0 0.0
    %838 = vmatpush1.msra.mxu0 0.0
    %839 = vmatprep.subr.mxu0 0.0
    %840 = vmatpush1.msra.mxu0 0.0
    %841 = vmatprep.subr.mxu0 0.0
    %842 = vmatpush1.msra.mxu0 0.0
    %843 = vmatprep.subr.mxu0 0.0
    %844 = vmatpush1.msra.mxu0 0.0
    %845 = vmatprep.subr.mxu0 0.0
    %846 = vmatpush1.msra.mxu0 0.0
    %847 = vmatprep.subr.mxu0 0.0
    %848 = vmatpush1.msra.mxu0 0.0
    %849 = vmatprep.subr.mxu0 0.0
    %850 = vmatpush1.msra.mxu0 0.0
    %851 = vmatprep.subr.mxu0 0.0
    %852 = vmatpush1.msra.mxu0 0.0
    %853 = vmatprep.subr.mxu0 0.0
    %854 = vmatpush1.msra.mxu0 0.0
    %855 = vmatprep.subr.mxu0 0.0
    %856 = vmatpush1.msra.mxu0 0.0
    %857 = vmatprep.subr.mxu0 0.0
    %858 = vmatpush1.msra.mxu0 0.0
    %859 = vmatprep.subr.mxu0 0.0
    %860 = vmatpush1.msra.mxu0 0.0
    %861 = vmatprep.subr.mxu0 0.0
    %862 = vmatpush1.msra.mxu0 0.0
    %863 = vmatprep.subr.mxu0 0.0
    %864 = vmatpush1.msra.mxu0 0.0
    %865 = vmatprep.subr.mxu0 0.0
    %866 = vmatpush1.msra.mxu0 0.0
    %867 = vmatprep.subr.mxu0 0.0
    %868 = vmatpush1.msra.mxu0 0.0
    %869 = vmatprep.subr.mxu0 0.0
    %870 = vmatpush1.msra.mxu0 0.0
    %871 = vmatprep.subr.mxu0 0.0
    %872 = vmatpush1.msra.mxu0 0.0
    %873 = vmatprep.subr.mxu0 0.0
    %874 = vmatpush1.msra.mxu0 0.0
    %875 = vmatprep.subr.mxu0 0.0
    %876 = vmatpush1.msra.mxu0 0.0
    %877 = vmatprep.subr.mxu0 0.0
    %878 = vmatpush1.msra.mxu0 0.0
    %879 = vmatprep.mubr.f32.mxu0 0.0
    %880 = vmatmul.mubr.f32.gmra.mrb[0].mxu0 %v813
    %v881 = vpop.f32.mrb[0].mxu0
    %v882 = vadd.f32 0.0, %v881
    %v883 = vpop.f32.mrb[0].mxu0
    %884 = vdwg.mxu0
    %v885 = vadd.f32 %v644, %v882
    %886 = vrot.lane.b32.xlu0 %v163, 104
    %v887 = vpop.permute.xlu0 %886
    %888 = vrot.lane.b32.xlu0 %v163, 72
    %v889 = vpop.permute.xlu0 %888
    %v890 = vsel %vm174, %v887, 0
    %v892 = vsel %vm174, %v889, 0
    %894 = vmatprep.subr.mxu0 0.0
    %895 = vmatpush1.xpose.msra.mxu0 %v892
    %896 = vmatprep.subr.mxu0 0.0
    %897 = vmatpush1.xpose.msra.mxu0 0.0
    %898 = vmatprep.subr.mxu0 0.0
    %899 = vmatpush1.xpose.msra.mxu0 0.0
    %900 = vmatprep.subr.mxu0 0.0
    %901 = vmatpush1.xpose.msra.mxu0 0.0
    %902 = vmatprep.subr.mxu0 0.0
    %903 = vmatpush1.xpose.msra.mxu0 0.0
    %904 = vmatprep.subr.mxu0 0.0
    %905 = vmatpush1.xpose.msra.mxu0 0.0
    %906 = vmatprep.subr.mxu0 0.0
    %907 = vmatpush1.xpose.msra.mxu0 0.0
    %908 = vmatprep.subr.mxu0 0.0
    %909 = vmatpush1.xpose.msra.mxu0 0.0
    %910 = vmatprep.subr.mxu0 0.0
    %911 = vmatpush1.xpose.msra.mxu0 0.0
    %912 = vmatprep.subr.mxu0 0.0
    %913 = vmatpush1.xpose.msra.mxu0 0.0
    %914 = vmatprep.subr.mxu0 0.0
    %915 = vmatpush1.xpose.msra.mxu0 0.0
    %916 = vmatprep.subr.mxu0 0.0
    %917 = vmatpush1.xpose.msra.mxu0 0.0
    %918 = vmatprep.subr.mxu0 0.0
    %919 = vmatpush1.xpose.msra.mxu0 0.0
    %920 = vmatprep.subr.mxu0 0.0
    %921 = vmatpush1.xpose.msra.mxu0 0.0
    %922 = vmatprep.subr.mxu0 0.0
    %923 = vmatpush1.xpose.msra.mxu0 0.0
    %924 = vmatprep.subr.mxu0 0.0
    %925 = vmatpush1.xpose.msra.mxu0 0.0
    %926 = vmatprep.subr.mxu0 0.0
    %927 = vmatpush1.xpose.msra.mxu0 0.0
    %928 = vmatprep.subr.mxu0 0.0
    %929 = vmatpush1.xpose.msra.mxu0 0.0
    %930 = vmatprep.subr.mxu0 0.0
    %931 = vmatpush1.xpose.msra.mxu0 0.0
    %932 = vmatprep.subr.mxu0 0.0
    %933 = vmatpush1.xpose.msra.mxu0 0.0
    %934 = vmatprep.subr.mxu0 0.0
    %935 = vmatpush1.xpose.msra.mxu0 0.0
    %936 = vmatprep.subr.mxu0 0.0
    %937 = vmatpush1.xpose.msra.mxu0 0.0
    %938 = vmatprep.subr.mxu0 0.0
    %939 = vmatpush1.xpose.msra.mxu0 0.0
    %940 = vmatprep.subr.mxu0 0.0
    %941 = vmatpush1.xpose.msra.mxu0 0.0
    %942 = vmatprep.subr.mxu0 0.0
    %943 = vmatpush1.xpose.msra.mxu0 0.0
    %944 = vmatprep.subr.mxu0 0.0
    %945 = vmatpush1.xpose.msra.mxu0 0.0
    %946 = vmatprep.subr.mxu0 0.0
    %947 = vmatpush1.xpose.msra.mxu0 0.0
    %948 = vmatprep.subr.mxu0 0.0
    %949 = vmatpush1.xpose.msra.mxu0 0.0
    %950 = vmatprep.subr.mxu0 0.0
    %951 = vmatpush1.xpose.msra.mxu0 0.0
    %952 = vmatprep.subr.mxu0 0.0
    %953 = vmatpush1.xpose.msra.mxu0 0.0
    %954 = vmatprep.subr.mxu0 0.0
    %955 = vmatpush1.xpose.msra.mxu0 0.0
    %956 = vmatprep.subr.mxu0 0.0
    %957 = vmatpush1.xpose.msra.mxu0 0.0
    %958 = vmatprep.mubr.f32.mxu0 0.0
    %959 = vmatmul.mubr.f32.gmra.mrb[0].mxu0 %v890
    %v960 = vpop.f32.mrb[0].mxu0
    %v961 = vadd.f32 0.0, %v960
    %v962 = vpop.f32.mrb[0].mxu0
    %963 = vdwg.mxu0
    %v964 = vsel %vm174, %v961, -inf
    %965 = vmax.xlane.f32.xlu0 %v964
    %v966 = vpop.xlane.xlu0 %965
    %v967 = vsub.f32 %v961, %v966
    %v968 = vmul.f32 %v967, 1.442695
    %v969 = vpow.pop %v968
    %v970 = vsel %vm174, %v969, 0.0
    %971 = vadd.xlane.f32.xlu0 %v970
    %v972 = vpop.xlane.xlu0 %971
    %v973 = vrcp.pop %v972
    %974 = vrot.lane.b32.xlu0 %v163, 40
    %v975 = vpop.permute.xlu0 %974
    %v978 = vsel %vm174, %v969, 0
    %980 = vmatprep.subr.mxu0 0.0
    %981 = vmatpush1.msra.mxu0 %v975
    %982 = vmatprep.subr.mxu0 0.0
    %983 = vmatpush1.msra.mxu0 0.0
    %984 = vmatprep.subr.mxu0 0.0
    %985 = vmatpush1.msra.mxu0 0.0
    %986 = vmatprep.subr.mxu0 0.0
    %987 = vmatpush1.msra.mxu0 0.0
    %988 = vmatprep.subr.mxu0 0.0
    %989 = vmatpush1.msra.mxu0 0.0
    %990 = vmatprep.subr.mxu0 0.0
    %991 = vmatpush1.msra.mxu0 0.0
    %992 = vmatprep.subr.mxu0 0.0
    %993 = vmatpush1.msra.mxu0 0.0
    %994 = vmatprep.subr.mxu0 0.0
    %995 = vmatpush1.msra.mxu0 0.0
    %996 = vmatprep.subr.mxu0 0.0
    %997 = vmatpush1.msra.mxu0 0.0
    %998 = vmatprep.subr.mxu0 0.0
    %999 = vmatpush1.msra.mxu0 0.0
    %1000 = vmatprep.subr.mxu0 0.0
    %1001 = vmatpush1.msra.mxu0 0.0
    %1002 = vmatprep.subr.mxu0 0.0
    %1003 = vmatpush1.msra.mxu0 0.0
    %1004 = vmatprep.subr.mxu0 0.0
    %1005 = vmatpush1.msra.mxu0 0.0
    %1006 = vmatprep.subr.mxu0 0.0
    %1007 = vmatpush1.msra.mxu0 0.0
    %1008 = vmatprep.subr.mxu0 0.0
    %1009 = vmatpush1.msra.mxu0 0.0
    %1010 = vmatprep.subr.mxu0 0.0
    %1011 = vmatpush1.msra.mxu0 0.0
    %1012 = vmatprep.subr.mxu0 0.0
    %1013 = vmatpush1.msra.mxu0 0.0
    %1014 = vmatprep.subr.mxu0 0.0
    %1015 = vmatpush1.msra.mxu0 0.0
    %1016 = vmatprep.subr.mxu0 0.0
    %1017 = vmatpush1.msra.mxu0 0.0
    %1018 = vmatprep.subr.mxu0 0.0
    %1019 = vmatpush1.msra.mxu0 0.0
    %1020 = vmatprep.subr.mxu0 0.0
    %1021 = vmatpush1.msra.mxu0 0.0
    %1022 = vmatprep.subr.mxu0 0.0
    %1023 = vmatpush1.msra.mxu0 0.0
    %1024 = vmatprep.subr.mxu0 0.0
    %1025 = vmatpush1.msra.mxu0 0.0
    %1026 = vmatprep.subr.mxu0 0.0
    %1027 = vmatpush1.msra.mxu0 0.0
    %1028 = vmatprep.subr.mxu0 0.0
    %1029 = vmatpush1.msra.mxu0 0.0
    %1030 = vmatprep.subr.mxu0 0.0
    %1031 = vmatpush1.msra.mxu0 0.0
    %1032 = vmatprep.subr.mxu0 0.0
    %1033 = vmatpush1.msra.mxu0 0.0
    %1034 = vmatprep.subr.mxu0 0.0
    %1035 = vmatpush1.msra.mxu0 0.0
    %1036 = vmatprep.subr.mxu0 0.0
    %1037 = vmatpush1.msra.mxu0 0.0
    %1038 = vmatprep.subr.mxu0 0.0
    %1039 = vmatpush1.msra.mxu0 0.0
    %1040 = vmatprep.subr.mxu0 0.0
    %1041 = vmatpush1.msra.mxu0 0.0
    %1042 = vmatprep.subr.mxu0 0.0
    %1043 = vmatpush1.msra.mxu0 0.0
    %1044 = vmatprep.mubr.f32.mxu0 0.0
    %1045 = vmatmul.mubr.f32.gmra.mrb[0].mxu0 %v978
    %v1046 = vpop.f32.mrb[0].mxu0
    %v1047 = vadd.f32 0.0, %v1046
    %v1048 = vpop.f32.mrb[0].mxu0
    %1049 = vdwg.mxu0
    %v1050 = vmul.f32 %v1047, %v973
    %v1052 = vsel %vm174, %v1050, 0
    %1054 = vmatprep.subr.mxu0 0.0
    %1055 = vmatpush1.msra.mxu0 %v40
    %1056 = vmatprep.subr.mxu0 0.0
    %1057 = vmatpush1.msra.mxu0 0.0
    %1058 = vmatprep.subr.mxu0 0.0
    %1059 = vmatpush1.msra.mxu0 0.0
    %1060 = vmatprep.subr.mxu0 0.0
    %1061 = vmatpush1.msra.mxu0 0.0
    %1062 = vmatprep.subr.mxu0 0.0
    %1063 = vmatpush1.msra.mxu0 0.0
    %1064 = vmatprep.subr.mxu0 0.0
    %1065 = vmatpush1.msra.mxu0 0.0
    %1066 = vmatprep.subr.mxu0 0.0
    %1067 = vmatpush1.msra.mxu0 0.0
    %1068 = vmatprep.subr.mxu0 0.0
    %1069 = vmatpush1.msra.mxu0 0.0
    %1070 = vmatprep.subr.mxu0 0.0
    %1071 = vmatpush1.msra.mxu0 0.0
    %1072 = vmatprep.subr.mxu0 0.0
    %1073 = vmatpush1.msra.mxu0 0.0
    %1074 = vmatprep.subr.mxu0 0.0
    %1075 = vmatpush1.msra.mxu0 0.0
    %1076 = vmatprep.subr.mxu0 0.0
    %1077 = vmatpush1.msra.mxu0 0.0
    %1078 = vmatprep.subr.mxu0 0.0
    %1079 = vmatpush1.msra.mxu0 0.0
    %1080 = vmatprep.subr.mxu0 0.0
    %1081 = vmatpush1.msra.mxu0 0.0
    %1082 = vmatprep.subr.mxu0 0.0
    %1083 = vmatpush1.msra.mxu0 0.0
    %1084 = vmatprep.subr.mxu0 0.0
    %1085 = vmatpush1.msra.mxu0 0.0
    %1086 = vmatprep.subr.mxu0 0.0
    %1087 = vmatpush1.msra.mxu0 0.0
    %1088 = vmatprep.subr.mxu0 0.0
    %1089 = vmatpush1.msra.mxu0 0.0
    %1090 = vmatprep.subr.mxu0 0.0
    %1091 = vmatpush1.msra.mxu0 0.0
    %1092 = vmatprep.subr.mxu0 0.0
    %1093 = vmatpush1.msra.mxu0 0.0
    %1094 = vmatprep.subr.mxu0 0.0
    %1095 = vmatpush1.msra.mxu0 0.0
    %1096 = vmatprep.subr.mxu0 0.0
    %1097 = vmatpush1.msra.mxu0 0.0
    %1098 = vmatprep.subr.mxu0 0.0
    %1099 = vmatpush1.msra.mxu0 0.0
    %1100 = vmatprep.subr.mxu0 0.0
    %1101 = vmatpush1.msra.mxu0 0.0
    %1102 = vmatprep.subr.mxu0 0.0
    %1103 = vmatpush1.msra.mxu0 0.0
    %1104 = vmatprep.subr.mxu0 0.0
    %1105 = vmatpush1.msra.mxu0 0.0
    %1106 = vmatprep.subr.mxu0 0.0
    %1107 = vmatpush1.msra.mxu0 0.0
    %1108 = vmatprep.subr.mxu0 0.0
    %1109 = vmatpush1.msra.mxu0 0.0
    %1110 = vmatprep.subr.mxu0 0.0
    %1111 = vmatpush1.msra.mxu0 0.0
    %1112 = vmatprep.subr.mxu0 0.0
    %1113 = vmatpush1.msra.mxu0 0.0
    %1114 = vmatprep.subr.mxu0 0.0
    %1115 = vmatpush1.msra.mxu0 0.0
    %1116 = vmatprep.subr.mxu0 0.0
    %1117 = vmatpush1.msra.mxu0 0.0
    %1118 = vmatprep.mubr.f32.mxu0 0.0
    %1119 = vmatmul.mubr.f32.gmra.mrb[0].mxu0 %v1052
    %v1120 = vpop.f32.mrb[0].mxu0
    %v1121 = vadd.f32 0.0, %v1120
    %v1122 = vpop.f32.mrb[0].mxu0
    %1123 = vdwg.mxu0
    %v1124 = vadd.f32 %v885, %v1121
    %1126 = vrot.lane.b32.xlu0 %v168, 96
    %v1127 = vpop.permute.xlu0 %1126
    %v1128 = vsel %vm174, %v168, 0
    %v1130 = vsel %vm174, %v1127, 0
    %1132 = vmatprep.subr.mxu0 0.0
    %1133 = vmatpush1.xpose.msra.mxu0 %v1130
    %1134 = vmatprep.subr.mxu0 0.0
    %1135 = vmatpush1.xpose.msra.mxu0 0.0
    %1136 = vmatprep.subr.mxu0 0.0
    %1137 = vmatpush1.xpose.msra.mxu0 0.0
    %1138 = vmatprep.subr.mxu0 0.0
    %1139 = vmatpush1.xpose.msra.mxu0 0.0
    %1140 = vmatprep.subr.mxu0 0.0
    %1141 = vmatpush1.xpose.msra.mxu0 0.0
    %1142 = vmatprep.subr.mxu0 0.0
    %1143 = vmatpush1.xpose.msra.mxu0 0.0
    %1144 = vmatprep.subr.mxu0 0.0
    %1145 = vmatpush1.xpose.msra.mxu0 0.0
    %1146 = vmatprep.subr.mxu0 0.0
    %1147 = vmatpush1.xpose.msra.mxu0 0.0
    %1148 = vmatprep.subr.mxu0 0.0
    %1149 = vmatpush1.xpose.msra.mxu0 0.0
    %1150 = vmatprep.subr.mxu0 0.0
    %1151 = vmatpush1.xpose.msra.mxu0 0.0
    %1152 = vmatprep.subr.mxu0 0.0
    %1153 = vmatpush1.xpose.msra.mxu0 0.0
    %1154 = vmatprep.subr.mxu0 0.0
    %1155 = vmatpush1.xpose.msra.mxu0 0.0
    %1156 = vmatprep.subr.mxu0 0.0
    %1157 = vmatpush1.xpose.msra.mxu0 0.0
    %1158 = vmatprep.subr.mxu0 0.0
    %1159 = vmatpush1.xpose.msra.mxu0 0.0
    %1160 = vmatprep.subr.mxu0 0.0
    %1161 = vmatpush1.xpose.msra.mxu0 0.0
    %1162 = vmatprep.subr.mxu0 0.0
    %1163 = vmatpush1.xpose.msra.mxu0 0.0
    %1164 = vmatprep.subr.mxu0 0.0
    %1165 = vmatpush1.xpose.msra.mxu0 0.0
    %1166 = vmatprep.subr.mxu0 0.0
    %1167 = vmatpush1.xpose.msra.mxu0 0.0
    %1168 = vmatprep.subr.mxu0 0.0
    %1169 = vmatpush1.xpose.msra.mxu0 0.0
    %1170 = vmatprep.subr.mxu0 0.0
    %1171 = vmatpush1.xpose.msra.mxu0 0.0
    %1172 = vmatprep.subr.mxu0 0.0
    %1173 = vmatpush1.xpose.msra.mxu0 0.0
    %1174 = vmatprep.subr.mxu0 0.0
    %1175 = vmatpush1.xpose.msra.mxu0 0.0
    %1176 = vmatprep.subr.mxu0 0.0
    %1177 = vmatpush1.xpose.msra.mxu0 0.0
    %1178 = vmatprep.subr.mxu0 0.0
    %1179 = vmatpush1.xpose.msra.mxu0 0.0
    %1180 = vmatprep.subr.mxu0 0.0
    %1181 = vmatpush1.xpose.msra.mxu0 0.0
    %1182 = vmatprep.subr.mxu0 0.0
    %1183 = vmatpush1.xpose.msra.mxu0 0.0
    %1184 = vmatprep.subr.mxu0 0.0
    %1185 = vmatpush1.xpose.msra.mxu0 0.0
    %1186 = vmatprep.subr.mxu0 0.0
    %1187 = vmatpush1.xpose.msra.mxu0 0.0
    %1188 = vmatprep.subr.mxu0 0.0
    %1189 = vmatpush1.xpose.msra.mxu0 0.0
    %1190 = vmatprep.subr.mxu0 0.0
    %1191 = vmatpush1.xpose.msra.mxu0 0.0
    %1192 = vmatprep.subr.mxu0 0.0
    %1193 = vmatpush1.xpose.msra.mxu0 0.0
    %1194 = vmatprep.subr.mxu0 0.0
    %1195 = vmatpush1.xpose.msra.mxu0 0.0
    %1196 = vmatprep.mubr.f32.mxu0 0.0
    %1197 = vmatmul.mubr.f32.gmra.mrb[0].mxu0 %v1128
    %v1198 = vpop.f32.mrb[0].mxu0
    %v1199 = vadd.f32 0.0, %v1198
    %v1200 = vpop.f32.mrb[0].mxu0
    %1201 = vdwg.mxu0
    %v1202 = vsel %vm174, %v1199, -inf
    %1203 = vmax.xlane.f32.xlu0 %v1202
    %v1204 = vpop.xlane.xlu0 %1203
    %v1205 = vsub.f32 %v1199, %v1204
    %v1206 = vmul.f32 %v1205, 1.442695
    %v1207 = vpow.pop %v1206
    %v1208 = vsel %vm174, %v1207, 0.0
    %1209 = vadd.xlane.f32.xlu0 %v1208
    %v1210 = vpop.xlane.xlu0 %1209
    %v1211 = vrcp.pop %v1210
    %1212 = vrot.lane.b32.xlu0 %v168, 64
    %v1213 = vpop.permute.xlu0 %1212
    %v1216 = vsel %vm174, %v1207, 0
    %1218 = vmatprep.subr.mxu0 0.0
    %1219 = vmatpush1.msra.mxu0 %v1213
    %1220 = vmatprep.subr.mxu0 0.0
    %1221 = vmatpush1.msra.mxu0 0.0
    %1222 = vmatprep.subr.mxu0 0.0
    %1223 = vmatpush1.msra.mxu0 0.0
    %1224 = vmatprep.subr.mxu0 0.0
    %1225 = vmatpush1.msra.mxu0 0.0
    %1226 = vmatprep.subr.mxu0 0.0
    %1227 = vmatpush1.msra.mxu0 0.0
    %1228 = vmatprep.subr.mxu0 0.0
    %1229 = vmatpush1.msra.mxu0 0.0
    %1230 = vmatprep.subr.mxu0 0.0
    %1231 = vmatpush1.msra.mxu0 0.0
    %1232 = vmatprep.subr.mxu0 0.0
    %1233 = vmatpush1.msra.mxu0 0.0
    %1234 = vmatprep.subr.mxu0 0.0
    %1235 = vmatpush1.msra.mxu0 0.0
    %1236 = vmatprep.subr.mxu0 0.0
    %1237 = vmatpush1.msra.mxu0 0.0
    %1238 = vmatprep.subr.mxu0 0.0
    %1239 = vmatpush1.msra.mxu0 0.0
    %1240 = vmatprep.subr.mxu0 0.0
    %1241 = vmatpush1.msra.mxu0 0.0
    %1242 = vmatprep.subr.mxu0 0.0
    %1243 = vmatpush1.msra.mxu0 0.0
    %1244 = vmatprep.subr.mxu0 0.0
    %1245 = vmatpush1.msra.mxu0 0.0
    %1246 = vmatprep.subr.mxu0 0.0
    %1247 = vmatpush1.msra.mxu0 0.0
    %1248 = vmatprep.subr.mxu0 0.0
    %1249 = vmatpush1.msra.mxu0 0.0
    %1250 = vmatprep.subr.mxu0 0.0
    %1251 = vmatpush1.msra.mxu0 0.0
    %1252 = vmatprep.subr.mxu0 0.0
    %1253 = vmatpush1.msra.mxu0 0.0
    %1254 = vmatprep.subr.mxu0 0.0
    %1255 = vmatpush1.msra.mxu0 0.0
    %1256 = vmatprep.subr.mxu0 0.0
    %1257 = vmatpush1.msra.mxu0 0.0
    %1258 = vmatprep.subr.mxu0 0.0
    %1259 = vmatpush1.msra.mxu0 0.0
    %1260 = vmatprep.subr.mxu0 0.0
    %1261 = vmatpush1.msra.mxu0 0.0
    %1262 = vmatprep.subr.mxu0 0.0
    %1263 = vmatpush1.msra.mxu0 0.0
    %1264 = vmatprep.subr.mxu0 0.0
    %1265 = vmatpush1.msra.mxu0 0.0
    %1266 = vmatprep.subr.mxu0 0.0
    %1267 = vmatpush1.msra.mxu0 0.0
    %1268 = vmatprep.subr.mxu0 0.0
    %1269 = vmatpush1.msra.mxu0 0.0
    %1270 = vmatprep.subr.mxu0 0.0
    %1271 = vmatpush1.msra.mxu0 0.0
    %1272 = vmatprep.subr.mxu0 0.0
    %1273 = vmatpush1.msra.mxu0 0.0
    %1274 = vmatprep.subr.mxu0 0.0
    %1275 = vmatpush1.msra.mxu0 0.0
    %1276 = vmatprep.subr.mxu0 0.0
    %1277 = vmatpush1.msra.mxu0 0.0
    %1278 = vmatprep.subr.mxu0 0.0
    %1279 = vmatpush1.msra.mxu0 0.0
    %1280 = vmatprep.subr.mxu0 0.0
    %1281 = vmatpush1.msra.mxu0 0.0
    %1282 = vmatprep.mubr.f32.mxu0 0.0
    %1283 = vmatmul.mubr.f32.gmra.mrb[0].mxu0 %v1216
    %v1284 = vpop.f32.mrb[0].mxu0
    %v1285 = vadd.f32 0.0, %v1284
    %v1286 = vpop.f32.mrb[0].mxu0
    %1287 = vdwg.mxu0
    %v1288 = vmul.f32 %v1285, %v1211
    %1289 = vrot.lane.b32.xlu0 %v168, 120
    %v1290 = vpop.permute.xlu0 %1289
    %1291 = vrot.lane.b32.xlu0 %v168, 88
    %v1292 = vpop.permute.xlu0 %1291
    %v1293 = vsel %vm174, %v1290, 0
    %v1295 = vsel %vm174, %v1292, 0
    %1297 = vmatprep.subr.mxu0 0.0
    %1298 = vmatpush1.xpose.msra.mxu0 %v1295
    %1299 = vmatprep.subr.mxu0 0.0
    %1300 = vmatpush1.xpose.msra.mxu0 0.0
    %1301 = vmatprep.subr.mxu0 0.0
    %1302 = vmatpush1.xpose.msra.mxu0 0.0
    %1303 = vmatprep.subr.mxu0 0.0
    %1304 = vmatpush1.xpose.msra.mxu0 0.0
    %1305 = vmatprep.subr.mxu0 0.0
    %1306 = vmatpush1.xpose.msra.mxu0 0.0
    %1307 = vmatprep.subr.mxu0 0.0
    %1308 = vmatpush1.xpose.msra.mxu0 0.0
    %1309 = vmatprep.subr.mxu0 0.0
    %1310 = vmatpush1.xpose.msra.mxu0 0.0
    %1311 = vmatprep.subr.mxu0 0.0
    %1312 = vmatpush1.xpose.msra.mxu0 0.0
    %1313 = vmatprep.subr.mxu0 0.0
    %1314 = vmatpush1.xpose.msra.mxu0 0.0
    %1315 = vmatprep.subr.mxu0 0.0
    %1316 = vmatpush1.xpose.msra.mxu0 0.0
    %1317 = vmatprep.subr.mxu0 0.0
    %1318 = vmatpush1.xpose.msra.mxu0 0.0
    %1319 = vmatprep.subr.mxu0 0.0
    %1320 = vmatpush1.xpose.msra.mxu0 0.0
    %1321 = vmatprep.subr.mxu0 0.0
    %1322 = vmatpush1.xpose.msra.mxu0 0.0
    %1323 = vmatprep.subr.mxu0 0.0
    %1324 = vmatpush1.xpose.msra.mxu0 0.0
    %1325 = vmatprep.subr.mxu0 0.0
    %1326 = vmatpush1.xpose.msra.mxu0 0.0
    %1327 = vmatprep.subr.mxu0 0.0
    %1328 = vmatpush1.xpose.msra.mxu0 0.0
    %1329 = vmatprep.subr.mxu0 0.0
    %1330 = vmatpush1.xpose.msra.mxu0 0.0
    %1331 = vmatprep.subr.mxu0 0.0
    %1332 = vmatpush1.xpose.msra.mxu0 0.0
    %1333 = vmatprep.subr.mxu0 0.0
    %1334 = vmatpush1.xpose.msra.mxu0 0.0
    %1335 = vmatprep.subr.mxu0 0.0
    %1336 = vmatpush1.xpose.msra.mxu0 0.0
    %1337 = vmatprep.subr.mxu0 0.0
    %1338 = vmatpush1.xpose.msra.mxu0 0.0
    %1339 = vmatprep.subr.mxu0 0.0
    %1340 = vmatpush1.xpose.msra.mxu0 0.0
    %1341 = vmatprep.subr.mxu0 0.0
    %1342 = vmatpush1.xpose.msra.mxu0 0.0
    %1343 = vmatprep.subr.mxu0 0.0
    %1344 = vmatpush1.xpose.msra.mxu0 0.0
    %1345 = vmatprep.subr.mxu0 0.0
    %1346 = vmatpush1.xpose.msra.mxu0 0.0
    %1347 = vmatprep.subr.mxu0 0.0
    %1348 = vmatpush1.xpose.msra.mxu0 0.0
    %1349 = vmatprep.subr.mxu0 0.0
    %1350 = vmatpush1.xpose.msra.mxu0 0.0
    %1351 = vmatprep.subr.mxu0 0.0
    %1352 = vmatpush1.xpose.msra.mxu0 0.0
    %1353 = vmatprep.subr.mxu0 0.0
    %1354 = vmatpush1.xpose.msra.mxu0 0.0
    %1355 = vmatprep.subr.mxu0 0.0
    %1356 = vmatpush1.xpose.msra.mxu0 0.0
    %1357 = vmatprep.subr.mxu0 0.0
    %1358 = vmatpush1.xpose.msra.mxu0 0.0
    %1359 = vmatprep.subr.mxu0 0.0
    %1360 = vmatpush1.xpose.msra.mxu0 0.0
    %1361 = vmatprep.mubr.f32.mxu0 0.0
    %1362 = vmatmul.mubr.f32.gmra.mrb[0].mxu0 %v1293
    %v1363 = vpop.f32.mrb[0].mxu0
    %v1364 = vadd.f32 0.0, %v1363
    %v1365 = vpop.f32.mrb[0].mxu0
    %1366 = vdwg.mxu0
    %v1367 = vsel %vm174, %v1364, -inf
    %1368 = vmax.xlane.f32.xlu0 %v1367
    %v1369 = vpop.xlane.xlu0 %1368
    %v1370 = vsub.f32 %v1364, %v1369
    %v1371 = vmul.f32 %v1370, 1.442695
    %v1372 = vpow.pop %v1371
    %v1373 = vsel %vm174, %v1372, 0.0
    %1374 = vadd.xlane.f32.xlu0 %v1373
    %v1375 = vpop.xlane.xlu0 %1374
    %v1376 = vrcp.pop %v1375
    %1377 = vrot.lane.b32.xlu0 %v168, 56
    %v1378 = vpop.permute.xlu0 %1377
    %v1381 = vsel %vm174, %v1372, 0
    %1383 = vmatprep.subr.mxu0 0.0
    %1384 = vmatpush1.msra.mxu0 %v1378
    %1385 = vmatprep.subr.mxu0 0.0
    %1386 = vmatpush1.msra.mxu0 0.0
    %1387 = vmatprep.subr.mxu0 0.0
    %1388 = vmatpush1.msra.mxu0 0.0
    %1389 = vmatprep.subr.mxu0 0.0
    %1390 = vmatpush1.msra.mxu0 0.0
    %1391 = vmatprep.subr.mxu0 0.0
    %1392 = vmatpush1.msra.mxu0 0.0
    %1393 = vmatprep.subr.mxu0 0.0
    %1394 = vmatpush1.msra.mxu0 0.0
    %1395 = vmatprep.subr.mxu0 0.0
    %1396 = vmatpush1.msra.mxu0 0.0
    %1397 = vmatprep.subr.mxu0 0.0
    %1398 = vmatpush1.msra.mxu0 0.0
    %1399 = vmatprep.subr.mxu0 0.0
    %1400 = vmatpush1.msra.mxu0 0.0
    %1401 = vmatprep.subr.mxu0 0.0
    %1402 = vmatpush1.msra.mxu0 0.0
    %1403 = vmatprep.subr.mxu0 0.0
    %1404 = vmatpush1.msra.mxu0 0.0
    %1405 = vmatprep.subr.mxu0 0.0
    %1406 = vmatpush1.msra.mxu0 0.0
    %1407 = vmatprep.subr.mxu0 0.0
    %1408 = vmatpush1.msra.mxu0 0.0
    %1409 = vmatprep.subr.mxu0 0.0
    %1410 = vmatpush1.msra.mxu0 0.0
    %1411 = vmatprep.subr.mxu0 0.0
    %1412 = vmatpush1.msra.mxu0 0.0
    %1413 = vmatprep.subr.mxu0 0.0
    %1414 = vmatpush1.msra.mxu0 0.0
    %1415 = vmatprep.subr.mxu0 0.0
    %1416 = vmatpush1.msra.mxu0 0.0
    %1417 = vmatprep.subr.mxu0 0.0
    %1418 = vmatpush1.msra.mxu0 0.0
    %1419 = vmatprep.subr.mxu0 0.0
    %1420 = vmatpush1.msra.mxu0 0.0
    %1421 = vmatprep.subr.mxu0 0.0
    %1422 = vmatpush1.msra.mxu0 0.0
    %1423 = vmatprep.subr.mxu0 0.0
    %1424 = vmatpush1.msra.mxu0 0.0
    %1425 = vmatprep.subr.mxu0 0.0
    %1426 = vmatpush1.msra.mxu0 0.0
    %1427 = vmatprep.subr.mxu0 0.0
    %1428 = vmatpush1.msra.mxu0 0.0
    %1429 = vmatprep.subr.mxu0 0.0
    %1430 = vmatpush1.msra.mxu0 0.0
    %1431 = vmatprep.subr.mxu0 0.0
    %1432 = vmatpush1.msra.mxu0 0.0
    %1433 = vmatprep.subr.mxu0 0.0
    %1434 = vmatpush1.msra.mxu0 0.0
    %1435 = vmatprep.subr.mxu0 0.0
    %1436 = vmatpush1.msra.mxu0 0.0
    %1437 = vmatprep.subr.mxu0 0.0
    %1438 = vmatpush1.msra.mxu0 0.0
    %1439 = vmatprep.subr.mxu0 0.0
    %1440 = vmatpush1.msra.mxu0 0.0
    %1441 = vmatprep.subr.mxu0 0.0
    %1442 = vmatpush1.msra.mxu0 0.0
    %1443 = vmatprep.subr.mxu0 0.0
    %1444 = vmatpush1.msra.mxu0 0.0
    %1445 = vmatprep.subr.mxu0 0.0
    %1446 = vmatpush1.msra.mxu0 0.0
    %1447 = vmatprep.mubr.f32.mxu0 0.0
    %1448 = vmatmul.mubr.f32.gmra.mrb[0].mxu0 %v1381
    %v1449 = vpop.f32.mrb[0].mxu0
    %v1450 = vadd.f32 0.0, %v1449
    %v1451 = vpop.f32.mrb[0].mxu0
    %1452 = vdwg.mxu0
    %v1453 = vmul.f32 %v1450, %v1376
    %v1455 = vsel %vm174, %v1453, 0
    %1457 = vmatprep.subr.mxu0 0.0
    %1458 = vmatpush1.msra.mxu0 %v38
    %1459 = vmatprep.subr.mxu0 0.0
    %1460 = vmatpush1.msra.mxu0 0.0
    %1461 = vmatprep.subr.mxu0 0.0
    %1462 = vmatpush1.msra.mxu0 0.0
    %1463 = vmatprep.subr.mxu0 0.0
    %1464 = vmatpush1.msra.mxu0 0.0
    %1465 = vmatprep.subr.mxu0 0.0
    %1466 = vmatpush1.msra.mxu0 0.0
    %1467 = vmatprep.subr.mxu0 0.0
    %1468 = vmatpush1.msra.mxu0 0.0
    %1469 = vmatprep.subr.mxu0 0.0
    %1470 = vmatpush1.msra.mxu0 0.0
    %1471 = vmatprep.subr.mxu0 0.0
    %1472 = vmatpush1.msra.mxu0 0.0
    %1473 = vmatprep.subr.mxu0 0.0
    %1474 = vmatpush1.msra.mxu0 0.0
    %1475 = vmatprep.subr.mxu0 0.0
    %1476 = vmatpush1.msra.mxu0 0.0
    %1477 = vmatprep.subr.mxu0 0.0
    %1478 = vmatpush1.msra.mxu0 0.0
    %1479 = vmatprep.subr.mxu0 0.0
    %1480 = vmatpush1.msra.mxu0 0.0
    %1481 = vmatprep.subr.mxu0 0.0
    %1482 = vmatpush1.msra.mxu0 0.0
    %1483 = vmatprep.subr.mxu0 0.0
    %1484 = vmatpush1.msra.mxu0 0.0
    %1485 = vmatprep.subr.mxu0 0.0
    %1486 = vmatpush1.msra.mxu0 0.0
    %1487 = vmatprep.subr.mxu0 0.0
    %1488 = vmatpush1.msra.mxu0 0.0
    %1489 = vmatprep.subr.mxu0 0.0
    %1490 = vmatpush1.msra.mxu0 0.0
    %1491 = vmatprep.subr.mxu0 0.0
    %1492 = vmatpush1.msra.mxu0 0.0
    %1493 = vmatprep.subr.mxu0 0.0
    %1494 = vmatpush1.msra.mxu0 0.0
    %1495 = vmatprep.subr.mxu0 0.0
    %1496 = vmatpush1.msra.mxu0 0.0
    %1497 = vmatprep.subr.mxu0 0.0
    %1498 = vmatpush1.msra.mxu0 0.0
    %1499 = vmatprep.subr.mxu0 0.0
    %1500 = vmatpush1.msra.mxu0 0.0
    %1501 = vmatprep.subr.mxu0 0.0
    %1502 = vmatpush1.msra.mxu0 0.0
    %1503 = vmatprep.subr.mxu0 0.0
    %1504 = vmatpush1.msra.mxu0 0.0
    %1505 = vmatprep.subr.mxu0 0.0
    %1506 = vmatpush1.msra.mxu0 0.0
    %1507 = vmatprep.subr.mxu0 0.0
    %1508 = vmatpush1.msra.mxu0 0.0
    %1509 = vmatprep.subr.mxu0 0.0
    %1510 = vmatpush1.msra.mxu0 0.0
    %1511 = vmatprep.subr.mxu0 0.0
    %1512 = vmatpush1.msra.mxu0 0.0
    %1513 = vmatprep.subr.mxu0 0.0
    %1514 = vmatpush1.msra.mxu0 0.0
    %1515 = vmatprep.subr.mxu0 0.0
    %1516 = vmatpush1.msra.mxu0 0.0
    %1517 = vmatprep.subr.mxu0 0.0
    %1518 = vmatpush1.msra.mxu0 0.0
    %1519 = vmatprep.subr.mxu0 0.0
    %1520 = vmatpush1.msra.mxu0 0.0
    %1521 = vmatprep.mubr.f32.mxu0 0.0
    %1522 = vmatmul.mubr.f32.gmra.mrb[0].mxu0 %v1455
    %v1523 = vpop.f32.mrb[0].mxu0
    %v1524 = vadd.f32 0.0, %v1523
    %v1525 = vpop.f32.mrb[0].mxu0
    %1526 = vdwg.mxu0
    %v1528 = vsel %vm174, %v1288, 0
    %1530 = vmatprep.subr.mxu0 0.0
    %1531 = vmatpush1.msra.mxu0 %v37
    %1532 = vmatprep.subr.mxu0 0.0
    %1533 = vmatpush1.msra.mxu0 0.0
    %1534 = vmatprep.subr.mxu0 0.0
    %1535 = vmatpush1.msra.mxu0 0.0
    %1536 = vmatprep.subr.mxu0 0.0
    %1537 = vmatpush1.msra.mxu0 0.0
    %1538 = vmatprep.subr.mxu0 0.0
    %1539 = vmatpush1.msra.mxu0 0.0
    %1540 = vmatprep.subr.mxu0 0.0
    %1541 = vmatpush1.msra.mxu0 0.0
    %1542 = vmatprep.subr.mxu0 0.0
    %1543 = vmatpush1.msra.mxu0 0.0
    %1544 = vmatprep.subr.mxu0 0.0
    %1545 = vmatpush1.msra.mxu0 0.0
    %1546 = vmatprep.subr.mxu0 0.0
    %1547 = vmatpush1.msra.mxu0 0.0
    %1548 = vmatprep.subr.mxu0 0.0
    %1549 = vmatpush1.msra.mxu0 0.0
    %1550 = vmatprep.subr.mxu0 0.0
    %1551 = vmatpush1.msra.mxu0 0.0
    %1552 = vmatprep.subr.mxu0 0.0
    %1553 = vmatpush1.msra.mxu0 0.0
    %1554 = vmatprep.subr.mxu0 0.0
    %1555 = vmatpush1.msra.mxu0 0.0
    %1556 = vmatprep.subr.mxu0 0.0
    %1557 = vmatpush1.msra.mxu0 0.0
    %1558 = vmatprep.subr.mxu0 0.0
    %1559 = vmatpush1.msra.mxu0 0.0
    %1560 = vmatprep.subr.mxu0 0.0
    %1561 = vmatpush1.msra.mxu0 0.0
    %1562 = vmatprep.subr.mxu0 0.0
    %1563 = vmatpush1.msra.mxu0 0.0
    %1564 = vmatprep.subr.mxu0 0.0
    %1565 = vmatpush1.msra.mxu0 0.0
    %1566 = vmatprep.subr.mxu0 0.0
    %1567 = vmatpush1.msra.mxu0 0.0
    %1568 = vmatprep.subr.mxu0 0.0
    %1569 = vmatpush1.msra.mxu0 0.0
    %1570 = vmatprep.subr.mxu0 0.0
    %1571 = vmatpush1.msra.mxu0 0.0
    %1572 = vmatprep.subr.mxu0 0.0
    %1573 = vmatpush1.msra.mxu0 0.0
    %1574 = vmatprep.subr.mxu0 0.0
    %1575 = vmatpush1.msra.mxu0 0.0
    %1576 = vmatprep.subr.mxu0 0.0
    %1577 = vmatpush1.msra.mxu0 0.0
    %1578 = vmatprep.subr.mxu0 0.0
    %1579 = vmatpush1.msra.mxu0 0.0
    %1580 = vmatprep.subr.mxu0 0.0
    %1581 = vmatpush1.msra.mxu0 0.0
    %1582 = vmatprep.subr.mxu0 0.0
    %1583 = vmatpush1.msra.mxu0 0.0
    %1584 = vmatprep.subr.mxu0 0.0
    %1585 = vmatpush1.msra.mxu0 0.0
    %1586 = vmatprep.subr.mxu0 0.0
    %1587 = vmatpush1.msra.mxu0 0.0
    %1588 = vmatprep.subr.mxu0 0.0
    %1589 = vmatpush1.msra.mxu0 0.0
    %1590 = vmatprep.subr.mxu0 0.0
    %1591 = vmatpush1.msra.mxu0 0.0
    %1592 = vmatprep.subr.mxu0 0.0
    %1593 = vmatpush1.msra.mxu0 0.0
    %1594 = vmatprep.mubr.f32.mxu0 0.0
    %1595 = vmatmul.mubr.f32.gmra.mrb[0].mxu0 %v1528
    %v1596 = vpop.f32.mrb[0].mxu0
    %v1597 = vadd.f32 %v1524, %v1596
    %v1598 = vpop.f32.mrb[0].mxu0
    %1599 = vdwg.mxu0
    %1600 = vrot.lane.b32.xlu0 %v168, 112
    %v1601 = vpop.permute.xlu0 %1600
    %1602 = vrot.lane.b32.xlu0 %v168, 80
    %v1603 = vpop.permute.xlu0 %1602
    %v1604 = vsel %vm174, %v1601, 0
    %v1606 = vsel %vm174, %v1603, 0
    %1608 = vmatprep.subr.mxu0 0.0
    %1609 = vmatpush1.xpose.msra.mxu0 %v1606
    %1610 = vmatprep.subr.mxu0 0.0
    %1611 = vmatpush1.xpose.msra.mxu0 0.0
    %1612 = vmatprep.subr.mxu0 0.0
    %1613 = vmatpush1.xpose.msra.mxu0 0.0
    %1614 = vmatprep.subr.mxu0 0.0
    %1615 = vmatpush1.xpose.msra.mxu0 0.0
    %1616 = vmatprep.subr.mxu0 0.0
    %1617 = vmatpush1.xpose.msra.mxu0 0.0
    %1618 = vmatprep.subr.mxu0 0.0
    %1619 = vmatpush1.xpose.msra.mxu0 0.0
    %1620 = vmatprep.subr.mxu0 0.0
    %1621 = vmatpush1.xpose.msra.mxu0 0.0
    %1622 = vmatprep.subr.mxu0 0.0
    %1623 = vmatpush1.xpose.msra.mxu0 0.0
    %1624 = vmatprep.subr.mxu0 0.0
    %1625 = vmatpush1.xpose.msra.mxu0 0.0
    %1626 = vmatprep.subr.mxu0 0.0
    %1627 = vmatpush1.xpose.msra.mxu0 0.0
    %1628 = vmatprep.subr.mxu0 0.0
    %1629 = vmatpush1.xpose.msra.mxu0 0.0
    %1630 = vmatprep.subr.mxu0 0.0
    %1631 = vmatpush1.xpose.msra.mxu0 0.0
    %1632 = vmatprep.subr.mxu0 0.0
    %1633 = vmatpush1.xpose.msra.mxu0 0.0
    %1634 = vmatprep.subr.mxu0 0.0
    %1635 = vmatpush1.xpose.msra.mxu0 0.0
    %1636 = vmatprep.subr.mxu0 0.0
    %1637 = vmatpush1.xpose.msra.mxu0 0.0
    %1638 = vmatprep.subr.mxu0 0.0
    %1639 = vmatpush1.xpose.msra.mxu0 0.0
    %1640 = vmatprep.subr.mxu0 0.0
    %1641 = vmatpush1.xpose.msra.mxu0 0.0
    %1642 = vmatprep.subr.mxu0 0.0
    %1643 = vmatpush1.xpose.msra.mxu0 0.0
    %1644 = vmatprep.subr.mxu0 0.0
    %1645 = vmatpush1.xpose.msra.mxu0 0.0
    %1646 = vmatprep.subr.mxu0 0.0
    %1647 = vmatpush1.xpose.msra.mxu0 0.0
    %1648 = vmatprep.subr.mxu0 0.0
    %1649 = vmatpush1.xpose.msra.mxu0 0.0
    %1650 = vmatprep.subr.mxu0 0.0
    %1651 = vmatpush1.xpose.msra.mxu0 0.0
    %1652 = vmatprep.subr.mxu0 0.0
    %1653 = vmatpush1.xpose.msra.mxu0 0.0
    %1654 = vmatprep.subr.mxu0 0.0
    %1655 = vmatpush1.xpose.msra.mxu0 0.0
    %1656 = vmatprep.subr.mxu0 0.0
    %1657 = vmatpush1.xpose.msra.mxu0 0.0
    %1658 = vmatprep.subr.mxu0 0.0
    %1659 = vmatpush1.xpose.msra.mxu0 0.0
    %1660 = vmatprep.subr.mxu0 0.0
    %1661 = vmatpush1.xpose.msra.mxu0 0.0
    %1662 = vmatprep.subr.mxu0 0.0
    %1663 = vmatpush1.xpose.msra.mxu0 0.0
    %1664 = vmatprep.subr.mxu0 0.0
    %1665 = vmatpush1.xpose.msra.mxu0 0.0
    %1666 = vmatprep.subr.mxu0 0.0
    %1667 = vmatpush1.xpose.msra.mxu0 0.0
    %1668 = vmatprep.subr.mxu0 0.0
    %1669 = vmatpush1.xpose.msra.mxu0 0.0
    %1670 = vmatprep.subr.mxu0 0.0
    %1671 = vmatpush1.xpose.msra.mxu0 0.0
    %1672 = vmatprep.mubr.f32.mxu0 0.0
    %1673 = vmatmul.mubr.f32.gmra.mrb[0].mxu0 %v1604
    %v1674 = vpop.f32.mrb[0].mxu0
    %v1675 = vadd.f32 0.0, %v1674
    %v1676 = vpop.f32.mrb[0].mxu0
    %1677 = vdwg.mxu0
    %v1678 = vsel %vm174, %v1675, -inf
    %1679 = vmax.xlane.f32.xlu0 %v1678
    %v1680 = vpop.xlane.xlu0 %1679
    %v1681 = vsub.f32 %v1675, %v1680
    %v1682 = vmul.f32 %v1681, 1.442695
    %v1683 = vpow.pop %v1682
    %v1684 = vsel %vm174, %v1683, 0.0
    %1685 = vadd.xlane.f32.xlu0 %v1684
    %v1686 = vpop.xlane.xlu0 %1685
    %v1687 = vrcp.pop %v1686
    %1688 = vrot.lane.b32.xlu0 %v168, 48
    %v1689 = vpop.permute.xlu0 %1688
    %v1692 = vsel %vm174, %v1683, 0
    %1694 = vmatprep.subr.mxu0 0.0
    %1695 = vmatpush1.msra.mxu0 %v1689
    %1696 = vmatprep.subr.mxu0 0.0
    %1697 = vmatpush1.msra.mxu0 0.0
    %1698 = vmatprep.subr.mxu0 0.0
    %1699 = vmatpush1.msra.mxu0 0.0
    %1700 = vmatprep.subr.mxu0 0.0
    %1701 = vmatpush1.msra.mxu0 0.0
    %1702 = vmatprep.subr.mxu0 0.0
    %1703 = vmatpush1.msra.mxu0 0.0
    %1704 = vmatprep.subr.mxu0 0.0
    %1705 = vmatpush1.msra.mxu0 0.0
    %1706 = vmatprep.subr.mxu0 0.0
    %1707 = vmatpush1.msra.mxu0 0.0
    %1708 = vmatprep.subr.mxu0 0.0
    %1709 = vmatpush1.msra.mxu0 0.0
    %1710 = vmatprep.subr.mxu0 0.0
    %1711 = vmatpush1.msra.mxu0 0.0
    %1712 = vmatprep.subr.mxu0 0.0
    %1713 = vmatpush1.msra.mxu0 0.0
    %1714 = vmatprep.subr.mxu0 0.0
    %1715 = vmatpush1.msra.mxu0 0.0
    %1716 = vmatprep.subr.mxu0 0.0
    %1717 = vmatpush1.msra.mxu0 0.0
    %1718 = vmatprep.subr.mxu0 0.0
    %1719 = vmatpush1.msra.mxu0 0.0
    %1720 = vmatprep.subr.mxu0 0.0
    %1721 = vmatpush1.msra.mxu0 0.0
    %1722 = vmatprep.subr.mxu0 0.0
    %1723 = vmatpush1.msra.mxu0 0.0
    %1724 = vmatprep.subr.mxu0 0.0
    %1725 = vmatpush1.msra.mxu0 0.0
    %1726 = vmatprep.subr.mxu0 0.0
    %1727 = vmatpush1.msra.mxu0 0.0
    %1728 = vmatprep.subr.mxu0 0.0
    %1729 = vmatpush1.msra.mxu0 0.0
    %1730 = vmatprep.subr.mxu0 0.0
    %1731 = vmatpush1.msra.mxu0 0.0
    %1732 = vmatprep.subr.mxu0 0.0
    %1733 = vmatpush1.msra.mxu0 0.0
    %1734 = vmatprep.subr.mxu0 0.0
    %1735 = vmatpush1.msra.mxu0 0.0
    %1736 = vmatprep.subr.mxu0 0.0
    %1737 = vmatpush1.msra.mxu0 0.0
    %1738 = vmatprep.subr.mxu0 0.0
    %1739 = vmatpush1.msra.mxu0 0.0
    %1740 = vmatprep.subr.mxu0 0.0
    %1741 = vmatpush1.msra.mxu0 0.0
    %1742 = vmatprep.subr.mxu0 0.0
    %1743 = vmatpush1.msra.mxu0 0.0
    %1744 = vmatprep.subr.mxu0 0.0
    %1745 = vmatpush1.msra.mxu0 0.0
    %1746 = vmatprep.subr.mxu0 0.0
    %1747 = vmatpush1.msra.mxu0 0.0
    %1748 = vmatprep.subr.mxu0 0.0
    %1749 = vmatpush1.msra.mxu0 0.0
    %1750 = vmatprep.subr.mxu0 0.0
    %1751 = vmatpush1.msra.mxu0 0.0
    %1752 = vmatprep.subr.mxu0 0.0
    %1753 = vmatpush1.msra.mxu0 0.0
    %1754 = vmatprep.subr.mxu0 0.0
    %1755 = vmatpush1.msra.mxu0 0.0
    %1756 = vmatprep.subr.mxu0 0.0
    %1757 = vmatpush1.msra.mxu0 0.0
    %1758 = vmatprep.mubr.f32.mxu0 0.0
    %1759 = vmatmul.mubr.f32.gmra.mrb[0].mxu0 %v1692
    %v1760 = vpop.f32.mrb[0].mxu0
    %v1761 = vadd.f32 0.0, %v1760
    %v1762 = vpop.f32.mrb[0].mxu0
    %1763 = vdwg.mxu0
    %v1764 = vmul.f32 %v1761, %v1687
    %v1766 = vsel %vm174, %v1764, 0
    %1768 = vmatprep.subr.mxu0 0.0
    %1769 = vmatpush1.msra.mxu0 %v39
    %1770 = vmatprep.subr.mxu0 0.0
    %1771 = vmatpush1.msra.mxu0 0.0
    %1772 = vmatprep.subr.mxu0 0.0
    %1773 = vmatpush1.msra.mxu0 0.0
    %1774 = vmatprep.subr.mxu0 0.0
    %1775 = vmatpush1.msra.mxu0 0.0
    %1776 = vmatprep.subr.mxu0 0.0
    %1777 = vmatpush1.msra.mxu0 0.0
    %1778 = vmatprep.subr.mxu0 0.0
    %1779 = vmatpush1.msra.mxu0 0.0
    %1780 = vmatprep.subr.mxu0 0.0
    %1781 = vmatpush1.msra.mxu0 0.0
    %1782 = vmatprep.subr.mxu0 0.0
    %1783 = vmatpush1.msra.mxu0 0.0
    %1784 = vmatprep.subr.mxu0 0.0
    %1785 = vmatpush1.msra.mxu0 0.0
    %1786 = vmatprep.subr.mxu0 0.0
    %1787 = vmatpush1.msra.mxu0 0.0
    %1788 = vmatprep.subr.mxu0 0.0
    %1789 = vmatpush1.msra.mxu0 0.0
    %1790 = vmatprep.subr.mxu0 0.0
    %1791 = vmatpush1.msra.mxu0 0.0
    %1792 = vmatprep.subr.mxu0 0.0
    %1793 = vmatpush1.msra.mxu0 0.0
    %1794 = vmatprep.subr.mxu0 0.0
    %1795 = vmatpush1.msra.mxu0 0.0
    %1796 = vmatprep.subr.mxu0 0.0
    %1797 = vmatpush1.msra.mxu0 0.0
    %1798 = vmatprep.subr.mxu0 0.0
    %1799 = vmatpush1.msra.mxu0 0.0
    %1800 = vmatprep.subr.mxu0 0.0
    %1801 = vmatpush1.msra.mxu0 0.0
    %1802 = vmatprep.subr.mxu0 0.0
    %1803 = vmatpush1.msra.mxu0 0.0
    %1804 = vmatprep.subr.mxu0 0.0
    %1805 = vmatpush1.msra.mxu0 0.0
    %1806 = vmatprep.subr.mxu0 0.0
    %1807 = vmatpush1.msra.mxu0 0.0
    %1808 = vmatprep.subr.mxu0 0.0
    %1809 = vmatpush1.msra.mxu0 0.0
    %1810 = vmatprep.subr.mxu0 0.0
    %1811 = vmatpush1.msra.mxu0 0.0
    %1812 = vmatprep.subr.mxu0 0.0
    %1813 = vmatpush1.msra.mxu0 0.0
    %1814 = vmatprep.subr.mxu0 0.0
    %1815 = vmatpush1.msra.mxu0 0.0
    %1816 = vmatprep.subr.mxu0 0.0
    %1817 = vmatpush1.msra.mxu0 0.0
    %1818 = vmatprep.subr.mxu0 0.0
    %1819 = vmatpush1.msra.mxu0 0.0
    %1820 = vmatprep.subr.mxu0 0.0
    %1821 = vmatpush1.msra.mxu0 0.0
    %1822 = vmatprep.subr.mxu0 0.0
    %1823 = vmatpush1.msra.mxu0 0.0
    %1824 = vmatprep.subr.mxu0 0.0
    %1825 = vmatpush1.msra.mxu0 0.0
    %1826 = vmatprep.subr.mxu0 0.0
    %1827 = vmatpush1.msra.mxu0 0.0
    %1828 = vmatprep.subr.mxu0 0.0
    %1829 = vmatpush1.msra.mxu0 0.0
    %1830 = vmatprep.subr.mxu0 0.0
    %1831 = vmatpush1.msra.mxu0 0.0
    %1832 = vmatprep.mubr.f32.mxu0 0.0
    %1833 = vmatmul.mubr.f32.gmra.mrb[0].mxu0 %v1766
    %v1834 = vpop.f32.mrb[0].mxu0
    %v1835 = vadd.f32 0.0, %v1834
    %v1836 = vpop.f32.mrb[0].mxu0
    %1837 = vdwg.mxu0
    %v1838 = vadd.f32 %v1597, %v1835
    %1839 = vrot.lane.b32.xlu0 %v168, 104
    %v1840 = vpop.permute.xlu0 %1839
    %1841 = vrot.lane.b32.xlu0 %v168, 72
    %v1842 = vpop.permute.xlu0 %1841
    %v1843 = vsel %vm174, %v1840, 0
    %v1845 = vsel %vm174, %v1842, 0
    %1847 = vmatprep.subr.mxu0 0.0
    %1848 = vmatpush1.xpose.msra.mxu0 %v1845
    %1849 = vmatprep.subr.mxu0 0.0
    %1850 = vmatpush1.xpose.msra.mxu0 0.0
    %1851 = vmatprep.subr.mxu0 0.0
    %1852 = vmatpush1.xpose.msra.mxu0 0.0
    %1853 = vmatprep.subr.mxu0 0.0
    %1854 = vmatpush1.xpose.msra.mxu0 0.0
    %1855 = vmatprep.subr.mxu0 0.0
    %1856 = vmatpush1.xpose.msra.mxu0 0.0
    %1857 = vmatprep.subr.mxu0 0.0
    %1858 = vmatpush1.xpose.msra.mxu0 0.0
    %1859 = vmatprep.subr.mxu0 0.0
    %1860 = vmatpush1.xpose.msra.mxu0 0.0
    %1861 = vmatprep.subr.mxu0 0.0
    %1862 = vmatpush1.xpose.msra.mxu0 0.0
    %1863 = vmatprep.subr.mxu0 0.0
    %1864 = vmatpush1.xpose.msra.mxu0 0.0
    %1865 = vmatprep.subr.mxu0 0.0
    %1866 = vmatpush1.xpose.msra.mxu0 0.0
    %1867 = vmatprep.subr.mxu0 0.0
    %1868 = vmatpush1.xpose.msra.mxu0 0.0
    %1869 = vmatprep.subr.mxu0 0.0
    %1870 = vmatpush1.xpose.msra.mxu0 0.0
    %1871 = vmatprep.subr.mxu0 0.0
    %1872 = vmatpush1.xpose.msra.mxu0 0.0
    %1873 = vmatprep.subr.mxu0 0.0
    %1874 = vmatpush1.xpose.msra.mxu0 0.0
    %1875 = vmatprep.subr.mxu0 0.0
    %1876 = vmatpush1.xpose.msra.mxu0 0.0
    %1877 = vmatprep.subr.mxu0 0.0
    %1878 = vmatpush1.xpose.msra.mxu0 0.0
    %1879 = vmatprep.subr.mxu0 0.0
    %1880 = vmatpush1.xpose.msra.mxu0 0.0
    %1881 = vmatprep.subr.mxu0 0.0
    %1882 = vmatpush1.xpose.msra.mxu0 0.0
    %1883 = vmatprep.subr.mxu0 0.0
    %1884 = vmatpush1.xpose.msra.mxu0 0.0
    %1885 = vmatprep.subr.mxu0 0.0
    %1886 = vmatpush1.xpose.msra.mxu0 0.0
    %1887 = vmatprep.subr.mxu0 0.0
    %1888 = vmatpush1.xpose.msra.mxu0 0.0
    %1889 = vmatprep.subr.mxu0 0.0
    %1890 = vmatpush1.xpose.msra.mxu0 0.0
    %1891 = vmatprep.subr.mxu0 0.0
    %1892 = vmatpush1.xpose.msra.mxu0 0.0
    %1893 = vmatprep.subr.mxu0 0.0
    %1894 = vmatpush1.xpose.msra.mxu0 0.0
    %1895 = vmatprep.subr.mxu0 0.0
    %1896 = vmatpush1.xpose.msra.mxu0 0.0
    %1897 = vmatprep.subr.mxu0 0.0
    %1898 = vmatpush1.xpose.msra.mxu0 0.0
    %1899 = vmatprep.subr.mxu0 0.0
    %1900 = vmatpush1.xpose.msra.mxu0 0.0
    %1901 = vmatprep.subr.mxu0 0.0
    %1902 = vmatpush1.xpose.msra.mxu0 0.0
    %1903 = vmatprep.subr.mxu0 0.0
    %1904 = vmatpush1.xpose.msra.mxu0 0.0
    %1905 = vmatprep.subr.mxu0 0.0
    %1906 = vmatpush1.xpose.msra.mxu0 0.0
    %1907 = vmatprep.subr.mxu0 0.0
    %1908 = vmatpush1.xpose.msra.mxu0 0.0
    %1909 = vmatprep.subr.mxu0 0.0
    %1910 = vmatpush1.xpose.msra.mxu0 0.0
    %1911 = vmatprep.mubr.f32.mxu0 0.0
    %1912 = vmatmul.mubr.f32.gmra.mrb[0].mxu0 %v1843
    %v1913 = vpop.f32.mrb[0].mxu0
    %v1914 = vadd.f32 0.0, %v1913
    %v1915 = vpop.f32.mrb[0].mxu0
    %1916 = vdwg.mxu0
    %v1917 = vsel %vm174, %v1914, -inf
    %1918 = vmax.xlane.f32.xlu0 %v1917
    %v1919 = vpop.xlane.xlu0 %1918
    %v1920 = vsub.f32 %v1914, %v1919
    %v1921 = vmul.f32 %v1920, 1.442695
    %v1922 = vpow.pop %v1921
    %v1923 = vsel %vm174, %v1922, 0.0
    %1924 = vadd.xlane.f32.xlu0 %v1923
    %v1925 = vpop.xlane.xlu0 %1924
    %v1926 = vrcp.pop %v1925
    %1927 = vrot.lane.b32.xlu0 %v168, 40
    %v1928 = vpop.permute.xlu0 %1927
    %v1931 = vsel %vm174, %v1922, 0
    %1933 = vmatprep.subr.mxu0 0.0
    %1934 = vmatpush1.msra.mxu0 %v1928
    %1935 = vmatprep.subr.mxu0 0.0
    %1936 = vmatpush1.msra.mxu0 0.0
    %1937 = vmatprep.subr.mxu0 0.0
    %1938 = vmatpush1.msra.mxu0 0.0
    %1939 = vmatprep.subr.mxu0 0.0
    %1940 = vmatpush1.msra.mxu0 0.0
    %1941 = vmatprep.subr.mxu0 0.0
    %1942 = vmatpush1.msra.mxu0 0.0
    %1943 = vmatprep.subr.mxu0 0.0
    %1944 = vmatpush1.msra.mxu0 0.0
    %1945 = vmatprep.subr.mxu0 0.0
    %1946 = vmatpush1.msra.mxu0 0.0
    %1947 = vmatprep.subr.mxu0 0.0
    %1948 = vmatpush1.msra.mxu0 0.0
    %1949 = vmatprep.subr.mxu0 0.0
    %1950 = vmatpush1.msra.mxu0 0.0
    %1951 = vmatprep.subr.mxu0 0.0
    %1952 = vmatpush1.msra.mxu0 0.0
    %1953 = vmatprep.subr.mxu0 0.0
    %1954 = vmatpush1.msra.mxu0 0.0
    %1955 = vmatprep.subr.mxu0 0.0
    %1956 = vmatpush1.msra.mxu0 0.0
    %1957 = vmatprep.subr.mxu0 0.0
    %1958 = vmatpush1.msra.mxu0 0.0
    %1959 = vmatprep.subr.mxu0 0.0
    %1960 = vmatpush1.msra.mxu0 0.0
    %1961 = vmatprep.subr.mxu0 0.0
    %1962 = vmatpush1.msra.mxu0 0.0
    %1963 = vmatprep.subr.mxu0 0.0
    %1964 = vmatpush1.msra.mxu0 0.0
    %1965 = vmatprep.subr.mxu0 0.0
    %1966 = vmatpush1.msra.mxu0 0.0
    %1967 = vmatprep.subr.mxu0 0.0
    %1968 = vmatpush1.msra.mxu0 0.0
    %1969 = vmatprep.subr.mxu0 0.0
    %1970 = vmatpush1.msra.mxu0 0.0
    %1971 = vmatprep.subr.mxu0 0.0
    %1972 = vmatpush1.msra.mxu0 0.0
    %1973 = vmatprep.subr.mxu0 0.0
    %1974 = vmatpush1.msra.mxu0 0.0
    %1975 = vmatprep.subr.mxu0 0.0
    %1976 = vmatpush1.msra.mxu0 0.0
    %1977 = vmatprep.subr.mxu0 0.0
    %1978 = vmatpush1.msra.mxu0 0.0
    %1979 = vmatprep.subr.mxu0 0.0
    %1980 = vmatpush1.msra.mxu0 0.0
    %1981 = vmatprep.subr.mxu0 0.0
    %1982 = vmatpush1.msra.mxu0 0.0
    %1983 = vmatprep.subr.mxu0 0.0
    %1984 = vmatpush1.msra.mxu0 0.0
    %1985 = vmatprep.subr.mxu0 0.0
    %1986 = vmatpush1.msra.mxu0 0.0
    %1987 = vmatprep.subr.mxu0 0.0
    %1988 = vmatpush1.msra.mxu0 0.0
    %1989 = vmatprep.subr.mxu0 0.0
    %1990 = vmatpush1.msra.mxu0 0.0
    %1991 = vmatprep.subr.mxu0 0.0
    %1992 = vmatpush1.msra.mxu0 0.0
    %1993 = vmatprep.subr.mxu0 0.0
    %1994 = vmatpush1.msra.mxu0 0.0
    %1995 = vmatprep.subr.mxu0 0.0
    %1996 = vmatpush1.msra.mxu0 0.0
    %1997 = vmatprep.mubr.f32.mxu0 0.0
    %1998 = vmatmul.mubr.f32.gmra.mrb[0].mxu0 %v1931
    %v1999 = vpop.f32.mrb[0].mxu0
    %v2000 = vadd.f32 0.0, %v1999
    %v2001 = vpop.f32.mrb[0].mxu0
    %2002 = vdwg.mxu0
    %v2003 = vmul.f32 %v2000, %v1926
    %v2005 = vsel %vm174, %v2003, 0
    %2007 = vmatprep.subr.mxu0 0.0
    %2008 = vmatpush1.msra.mxu0 %v40
    %2009 = vmatprep.subr.mxu0 0.0
    %2010 = vmatpush1.msra.mxu0 0.0
    %2011 = vmatprep.subr.mxu0 0.0
    %2012 = vmatpush1.msra.mxu0 0.0
    %2013 = vmatprep.subr.mxu0 0.0
    %2014 = vmatpush1.msra.mxu0 0.0
    %2015 = vmatprep.subr.mxu0 0.0
    %2016 = vmatpush1.msra.mxu0 0.0
    %2017 = vmatprep.subr.mxu0 0.0
    %2018 = vmatpush1.msra.mxu0 0.0
    %2019 = vmatprep.subr.mxu0 0.0
    %2020 = vmatpush1.msra.mxu0 0.0
    %2021 = vmatprep.subr.mxu0 0.0
    %2022 = vmatpush1.msra.mxu0 0.0
    %2023 = vmatprep.subr.mxu0 0.0
    %2024 = vmatpush1.msra.mxu0 0.0
    %2025 = vmatprep.subr.mxu0 0.0
    %2026 = vmatpush1.msra.mxu0 0.0
    %2027 = vmatprep.subr.mxu0 0.0
    %2028 = vmatpush1.msra.mxu0 0.0
    %2029 = vmatprep.subr.mxu0 0.0
    %2030 = vmatpush1.msra.mxu0 0.0
    %2031 = vmatprep.subr.mxu0 0.0
    %2032 = vmatpush1.msra.mxu0 0.0
    %2033 = vmatprep.subr.mxu0 0.0
    %2034 = vmatpush1.msra.mxu0 0.0
    %2035 = vmatprep.subr.mxu0 0.0
    %2036 = vmatpush1.msra.mxu0 0.0
    %2037 = vmatprep.subr.mxu0 0.0
    %2038 = vmatpush1.msra.mxu0 0.0
    %2039 = vmatprep.subr.mxu0 0.0
    %2040 = vmatpush1.msra.mxu0 0.0
    %2041 = vmatprep.subr.mxu0 0.0
    %2042 = vmatpush1.msra.mxu0 0.0
    %2043 = vmatprep.subr.mxu0 0.0
    %2044 = vmatpush1.msra.mxu0 0.0
    %2045 = vmatprep.subr.mxu0 0.0
    %2046 = vmatpush1.msra.mxu0 0.0
    %2047 = vmatprep.subr.mxu0 0.0
    %2048 = vmatpush1.msra.mxu0 0.0
    %2049 = vmatprep.subr.mxu0 0.0
    %2050 = vmatpush1.msra.mxu0 0.0
    %2051 = vmatprep.subr.mxu0 0.0
    %2052 = vmatpush1.msra.mxu0 0.0
    %2053 = vmatprep.subr.mxu0 0.0
    %2054 = vmatpush1.msra.mxu0 0.0
    %2055 = vmatprep.subr.mxu0 0.0
    %2056 = vmatpush1.msra.mxu0 0.0
    %2057 = vmatprep.subr.mxu0 0.0
    %2058 = vmatpush1.msra.mxu0 0.0
    %2059 = vmatprep.subr.mxu0 0.0
    %2060 = vmatpush1.msra.mxu0 0.0
    %2061 = vmatprep.subr.mxu0 0.0
    %2062 = vmatpush1.msra.mxu0 0.0
    %2063 = vmatprep.subr.mxu0 0.0
    %2064 = vmatpush1.msra.mxu0 0.0
    %2065 = vmatprep.subr.mxu0 0.0
    %2066 = vmatpush1.msra.mxu0 0.0
    %2067 = vmatprep.subr.mxu0 0.0
    %2068 = vmatpush1.msra.mxu0 0.0
    %2069 = vmatprep.subr.mxu0 0.0
    %2070 = vmatpush1.msra.mxu0 0.0
    %2071 = vmatprep.mubr.f32.mxu0 0.0
    %2072 = vmatmul.mubr.f32.gmra.mrb[0].mxu0 %v2005
    %v2073 = vpop.f32.mrb[0].mxu0
    %v2074 = vadd.f32 0.0, %v2073
    %v2075 = vpop.f32.mrb[0].mxu0
    %2076 = vdwg.mxu0
    %v2077 = vadd.f32 %v1838, %v2074
    %v2078 = vlaneseq
    %v2079 = vshrl.u32 %v2078, 7
    %v2080 = vsub.s32 0, %v2079
    %v2081 = vrot.slane %v82, %v2080
    %v2082 = vadd.f32 %v1124, %v2081
    %v2083 = vadd.f32 %v2077, %v2081
    %v2084 = vadd.f32 %v30, %v2082
    %v2085 = vadd.f32 %v31, %v2083
    %v2086 = vsel %vm89, %v2084, 0.0
    %2087 = vadd.xlane.f32.xlu0 %v2086
    %v2088 = vpop.xlane.xlu0 %2087
    %v2089 = vsel %vm89, %v2085, 0.0
    %2090 = vadd.xlane.f32.xlu0 %v2089
    %v2091 = vpop.xlane.xlu0 %2090
    %v2092 = vrcp.pop 32.0
    %v2093 = vmul.f32 %v2088, %v2092
    %v2094 = vmul.f32 %v2091, %v2092
    %v2095 = vsub.f32 %v2084, %v2093
    %v2096 = vsub.f32 %v2085, %v2094
    %v2097 = vmul.f32 %v2095, %v2095
    %v2098 = vmul.f32 %v2096, %v2096
    %v2099 = vsel %vm89, %v2097, 0.0
    %2100 = vadd.xlane.f32.xlu0 %v2099
    %v2101 = vpop.xlane.xlu0 %2100
    %v2102 = vsel %vm89, %v2098, 0.0
    %2103 = vadd.xlane.f32.xlu0 %v2102
    %v2104 = vpop.xlane.xlu0 %2103
    %v2105 = vmul.f32 %v2101, %v2092
    %v2106 = vmul.f32 %v2104, %v2092
    %v2107 = vadd.f32 %v2105, 1e-05
    %v2108 = vadd.f32 %v2106, 1e-05
    %v2109 = vrsqrt.pop %v2107
    %v2110 = vrsqrt.pop %v2108
    %v2111 = vmul.f32 %v2095, %v2109
    %v2112 = vmul.f32 %v2096, %v2110
    %v2113 = vlaneseq
    %v2114 = vshrl.u32 %v2113, 7
    %v2115 = vsub.s32 1, %v2114
    %v2116 = vrot.slane %v82, %v2115
    %v2117 = vmul.f32 %v2111, %v2116
    %v2118 = vmul.f32 %v2112, %v2116
    %v2119 = vlaneseq
    %v2120 = vshrl.u32 %v2119, 7
    %v2121 = vsub.s32 2, %v2120
    %v2122 = vrot.slane %v82, %v2121
    %v2123 = vadd.f32 %v2117, %v2122
    %v2124 = vadd.f32 %v2118, %v2122
    %v2126 = vlaneseq
    %v2127 = vshrl.u32 %v2126, 7
    %v2128 = vsub.s32 0, %v2127
    %v2129 = vrot.slane %v49, %v2128
    %v2130 = vlaneseq
    %v2131 = vshrl.u32 %v2130, 7
    %v2132 = vsub.s32 1, %v2131
    %v2133 = vrot.slane %v49, %v2132
    %v2137 = vsel %vm89, %v2123, 0
    %v2140 = vsel %vm89, %v2124, 0
    %2142 = vmatprep.subr.mxu0 %v42
    %2143 = vmatpush1.msra.mxu0 %v41
    %2144 = vmatprep.subr.mxu0 %v44
    %2145 = vmatpush1.msra.mxu0 %v43
    %2146 = vmatprep.subr.mxu0 %v46
    %2147 = vmatpush1.msra.mxu0 %v45
    %2148 = vmatprep.subr.mxu0 %v48
    %2149 = vmatpush1.msra.mxu0 %v47
    %2150 = vmatprep.subr.mxu0 0.0
    %2151 = vmatpush1.msra.mxu0 0.0
    %2152 = vmatprep.subr.mxu0 0.0
    %2153 = vmatpush1.msra.mxu0 0.0
    %2154 = vmatprep.subr.mxu0 0.0
    %2155 = vmatpush1.msra.mxu0 0.0
    %2156 = vmatprep.subr.mxu0 0.0
    %2157 = vmatpush1.msra.mxu0 0.0
    %2158 = vmatprep.subr.mxu0 0.0
    %2159 = vmatpush1.msra.mxu0 0.0
    %2160 = vmatprep.subr.mxu0 0.0
    %2161 = vmatpush1.msra.mxu0 0.0
    %2162 = vmatprep.subr.mxu0 0.0
    %2163 = vmatpush1.msra.mxu0 0.0
    %2164 = vmatprep.subr.mxu0 0.0
    %2165 = vmatpush1.msra.mxu0 0.0
    %2166 = vmatprep.subr.mxu0 0.0
    %2167 = vmatpush1.msra.mxu0 0.0
    %2168 = vmatprep.subr.mxu0 0.0
    %2169 = vmatpush1.msra.mxu0 0.0
    %2170 = vmatprep.subr.mxu0 0.0
    %2171 = vmatpush1.msra.mxu0 0.0
    %2172 = vmatprep.subr.mxu0 0.0
    %2173 = vmatpush1.msra.mxu0 0.0
    %2174 = vmatprep.subr.mxu0 0.0
    %2175 = vmatpush1.msra.mxu0 0.0
    %2176 = vmatprep.subr.mxu0 0.0
    %2177 = vmatpush1.msra.mxu0 0.0
    %2178 = vmatprep.subr.mxu0 0.0
    %2179 = vmatpush1.msra.mxu0 0.0
    %2180 = vmatprep.subr.mxu0 0.0
    %2181 = vmatpush1.msra.mxu0 0.0
    %2182 = vmatprep.subr.mxu0 0.0
    %2183 = vmatpush1.msra.mxu0 0.0
    %2184 = vmatprep.subr.mxu0 0.0
    %2185 = vmatpush1.msra.mxu0 0.0
    %2186 = vmatprep.subr.mxu0 0.0
    %2187 = vmatpush1.msra.mxu0 0.0
    %2188 = vmatprep.subr.mxu0 0.0
    %2189 = vmatpush1.msra.mxu0 0.0
    %2190 = vmatprep.subr.mxu0 0.0
    %2191 = vmatpush1.msra.mxu0 0.0
    %2192 = vmatprep.subr.mxu0 0.0
    %2193 = vmatpush1.msra.mxu0 0.0
    %2194 = vmatprep.subr.mxu0 0.0
    %2195 = vmatpush1.msra.mxu0 0.0
    %2196 = vmatprep.subr.mxu0 0.0
    %2197 = vmatpush1.msra.mxu0 0.0
    %2198 = vmatprep.subr.mxu0 0.0
    %2199 = vmatpush1.msra.mxu0 0.0
    %2200 = vmatprep.subr.mxu0 0.0
    %2201 = vmatpush1.msra.mxu0 0.0
    %2202 = vmatprep.subr.mxu0 0.0
    %2203 = vmatpush1.msra.mxu0 0.0
    %2204 = vmatprep.subr.mxu0 0.0
    %2205 = vmatpush1.msra.mxu0 0.0
    %2206 = vmatprep.mubr.f32.mxu0 0.0
    %2207 = vmatmul.mubr.f32.gmra.mrb[0].mxu0 %v2137
    %v2208 = vpop.f32.mrb[0].mxu0
    %v2209 = vadd.f32 %v2129, %v2208
    %v2210 = vpop.f32.mrb[0].mxu0
    %v2211 = vadd.f32 %v2133, %v2210
    %2212 = vmatprep.mubr.f32.mxu0 0.0
    %2213 = vmatmul.mubr.f32.gmra.mrb[0].mxu0 %v2140
    %v2214 = vpop.f32.mrb[0].mxu0
    %v2215 = vadd.f32 %v2129, %v2214
    %v2216 = vpop.f32.mrb[0].mxu0
    %v2217 = vadd.f32 %v2133, %v2216
    %2218 = vdwg.mxu0
    %v2219 = vmax.f32 %v2209, 0.0
    %v2220 = vmax.f32 %v2211, 0.0
    %v2221 = vmax.f32 %v2215, 0.0
    %v2222 = vmax.f32 %v2217, 0.0
    %v2223 = vlaneseq
    %v2224 = vshrl.u32 %v2223, 7
    %v2225 = vsub.s32 3, %v2224
    %v2226 = vrot.slane %v82, %v2225
    %2227 = vmatprep.subr.mxu0 0.0
    %2228 = vmatpush1.msra.mxu0 %v50
    %2229 = vmatprep.subr.mxu0 0.0
    %2230 = vmatpush1.msra.mxu0 %v51
    %2231 = vmatprep.subr.mxu0 0.0
    %2232 = vmatpush1.msra.mxu0 %v52
    %2233 = vmatprep.subr.mxu0 0.0
    %2234 = vmatpush1.msra.mxu0 %v53
    %2235 = vmatprep.subr.mxu0 0.0
    %2236 = vmatpush1.msra.mxu0 %v54
    %2237 = vmatprep.subr.mxu0 0.0
    %2238 = vmatpush1.msra.mxu0 %v55
    %2239 = vmatprep.subr.mxu0 0.0
    %2240 = vmatpush1.msra.mxu0 %v56
    %2241 = vmatprep.subr.mxu0 0.0
    %2242 = vmatpush1.msra.mxu0 %v57
    %2243 = vmatprep.subr.mxu0 0.0
    %2244 = vmatpush1.msra.mxu0 %v58
    %2245 = vmatprep.subr.mxu0 0.0
    %2246 = vmatpush1.msra.mxu0 %v59
    %2247 = vmatprep.subr.mxu0 0.0
    %2248 = vmatpush1.msra.mxu0 %v60
    %2249 = vmatprep.subr.mxu0 0.0
    %2250 = vmatpush1.msra.mxu0 %v61
    %2251 = vmatprep.subr.mxu0 0.0
    %2252 = vmatpush1.msra.mxu0 %v62
    %2253 = vmatprep.subr.mxu0 0.0
    %2254 = vmatpush1.msra.mxu0 %v63
    %2255 = vmatprep.subr.mxu0 0.0
    %2256 = vmatpush1.msra.mxu0 %v64
    %2257 = vmatprep.subr.mxu0 0.0
    %2258 = vmatpush1.msra.mxu0 %v65
    %2259 = vmatprep.subr.mxu0 0.0
    %2260 = vmatpush1.msra.mxu0 %v66
    %2261 = vmatprep.subr.mxu0 0.0
    %2262 = vmatpush1.msra.mxu0 %v67
    %2263 = vmatprep.subr.mxu0 0.0
    %2264 = vmatpush1.msra.mxu0 %v68
    %2265 = vmatprep.subr.mxu0 0.0
    %2266 = vmatpush1.msra.mxu0 %v69
    %2267 = vmatprep.subr.mxu0 0.0
    %2268 = vmatpush1.msra.mxu0 %v70
    %2269 = vmatprep.subr.mxu0 0.0
    %2270 = vmatpush1.msra.mxu0 %v71
    %2271 = vmatprep.subr.mxu0 0.0
    %2272 = vmatpush1.msra.mxu0 %v72
    %2273 = vmatprep.subr.mxu0 0.0
    %2274 = vmatpush1.msra.mxu0 %v73
    %2275 = vmatprep.subr.mxu0 0.0
    %2276 = vmatpush1.msra.mxu0 %v74
    %2277 = vmatprep.subr.mxu0 0.0
    %2278 = vmatpush1.msra.mxu0 %v75
    %2279 = vmatprep.subr.mxu0 0.0
    %2280 = vmatpush1.msra.mxu0 %v76
    %2281 = vmatprep.subr.mxu0 0.0
    %2282 = vmatpush1.msra.mxu0 %v77
    %2283 = vmatprep.subr.mxu0 0.0
    %2284 = vmatpush1.msra.mxu0 %v78
    %2285 = vmatprep.subr.mxu0 0.0
    %2286 = vmatpush1.msra.mxu0 %v79
    %2287 = vmatprep.subr.mxu0 0.0
    %2288 = vmatpush1.msra.mxu0 %v80
    %2289 = vmatprep.subr.mxu0 0.0
    %2290 = vmatpush1.msra.mxu0 %v81
    %2291 = vmatprep.mubr.f32.mxu0 %v2220
    %2292 = vmatmul.mubr.f32.gmra.mrb[0].mxu0 %v2219
    %v2293 = vpop.f32.mrb[0].mxu0
    %v2294 = vadd.f32 %v2226, %v2293
    %v2295 = vpop.f32.mrb[0].mxu0
    %2296 = vmatprep.mubr.f32.mxu0 %v2222
    %2297 = vmatmul.mubr.f32.gmra.mrb[0].mxu0 %v2221
    %v2298 = vpop.f32.mrb[0].mxu0
    %v2299 = vadd.f32 %v2226, %v2298
    %v2300 = vpop.f32.mrb[0].mxu0
    %2301 = vdwg.mxu0
    %v2302 = vadd.f32 %v2123, %v2294
    %v2303 = vadd.f32 %v2124, %v2299
    %v2304 = vsel %vm89, %v2302, 0.0
    %2305 = vadd.xlane.f32.xlu0 %v2304
    %v2306 = vpop.xlane.xlu0 %2305
    %v2307 = vsel %vm89, %v2303, 0.0
    %2308 = vadd.xlane.f32.xlu0 %v2307
    %v2309 = vpop.xlane.xlu0 %2308
    %v2310 = vmul.f32 %v2306, %v2092
    %v2311 = vmul.f32 %v2309, %v2092
    %v2312 = vsub.f32 %v2302, %v2310
    %v2313 = vsub.f32 %v2303, %v2311
    %v2314 = vmul.f32 %v2312, %v2312
    %v2315 = vmul.f32 %v2313, %v2313
    %v2316 = vsel %vm89, %v2314, 0.0
    %2317 = vadd.xlane.f32.xlu0 %v2316
    %v2318 = vpop.xlane.xlu0 %2317
    %v2319 = vsel %vm89, %v2315, 0.0
    %2320 = vadd.xlane.f32.xlu0 %v2319
    %v2321 = vpop.xlane.xlu0 %2320
    %v2322 = vmul.f32 %v2318, %v2092
    %v2323 = vmul.f32 %v2321, %v2092
    %v2324 = vadd.f32 %v2322, 1e-05
    %v2325 = vadd.f32 %v2323, 1e-05
    %v2326 = vrsqrt.pop %v2324
    %v2327 = vrsqrt.pop %v2325
    %v2328 = vmul.f32 %v2312, %v2326
    %v2329 = vmul.f32 %v2313, %v2327
    %v2330 = vlaneseq
    %v2331 = vshrl.u32 %v2330, 7
    %v2332 = vsub.s32 4, %v2331
    %v2333 = vrot.slane %v82, %v2332
    %v2334 = vmul.f32 %v2328, %v2333
    %v2335 = vmul.f32 %v2329, %v2333
    %v2336 = vlaneseq
    %v2337 = vshrl.u32 %v2336, 7
    %v2338 = vsub.s32 5, %v2337
    %v2339 = vrot.slane %v82, %v2338
    %v2340 = vadd.f32 %v2334, %v2339
    %v2341 = vadd.f32 %v2335, %v2339
    %2342 = vst.msk [vmem:[#allocation2] sm:$0xff] %vm89, %v2340
    %2343 = vst.msk [vmem:[#allocation2 + $0x8] sm:$0xff] %vm89, %v2341
    // Predicated region
    $region34: #{tpu_custom_call.1} parent=1 // pred_check
      _
    $region35: #{tpu_custom_call.1} parent=1 // pred_check_branch
      %2345 = sbr.rel (0) target = $region37
    $region36: #{tpu_custom_call.1} parent=1 // pred_region
      %s2347 = ssub.s32 256, 256
      %2348 = vsyncadd [#allocation3], %s2347
      %s2349 = sshll.u32 [#allocation2], 4
      %s2350 = int_to_ptr.vmem [resolvable:$true] %s2349
      %2355 = dma.vmem_to_hbm [thread:$0]  %s2350, 256, %s8, [#allocation3], 128, 128, 8
    $region37: #{tpu_custom_call.1} parent=1 // pred_fallthru
      _
    // Predicated region
    $region38: #{tpu_custom_call.1} parent=1 // pred_check
      _
    $region39: #{tpu_custom_call.1} parent=1 // pred_check_branch
      %2357 = sbr.rel (0) target = $region41
    $region40: #{tpu_custom_call.1} parent=1 // pred_region
      %2358 = dma.done [#allocation3], 256
    $region41: #{tpu_custom_call.1} parent=1 // pred_fallthru
      _
    %2359 = vsyncpa [#allocation3], 1

</llo_original>
